<compile_context>
chip_gen: v7x
topology: tpu7x:2x2x1
jax: 0.10.0
libtpu: 0.0.40
codegen_flags: <defaults>
</compile_context>

<pallas_src>
import math

import jax
import jax.numpy as jnp
from jax.experimental import pallas as pl
from jax.experimental.pallas import tpu as pltpu


# ----------------------------------------------------------------------------
# Kernel 1: scores = node_embs @ (scorer / ||scorer||) + mask, tiled over rows
# ----------------------------------------------------------------------------
_SCORE_VMEM_LIMIT = 32 * 1024 * 1024   # explicit scoped-VMEM limit (all chips)
_SCORE_EMB_BUDGET = 16 * 1024 * 1024   # budget for double-buffered emb blocks


def _score_kernel(emb_ref, scorer_ref, mask_ref, scores_ref):
    # (TN, F) @ (F, 1) matvec on the MXU, f32 accumulation, plus -inf mask.
    scores_ref[...] = (
        jnp.dot(emb_ref[...], scorer_ref[...],
                preferred_element_type=jnp.float32)
        + mask_ref[...]
    )


def _pick_row_tile(N, F, itemsize):
    ALIGN = 16  # multiple of 16 rows is a legal block for both f32 and bf16
    if N <= ALIGN:
        return N  # single block == full array (full-dim exception)
    # Largest tile whose double-buffered node_embs blocks fit the budget.
    max_tn = (_SCORE_EMB_BUDGET // (2 * F * itemsize)) // ALIGN * ALIGN
    max_tn = max(ALIGN, min(max_tn, 8192))
    # Prefer >= 2 grid steps so "parallel" can use both v7x TensorCores
    # (no-op on single-TC v5e/v6e).
    half = ((N + 1) // 2 + ALIGN - 1) // ALIGN * ALIGN
    return min(max_tn, half)


def compute_scores(node_embs, scorer_normalized, mask):
    N, F = node_embs.shape
    TN = _pick_row_tile(N, F, node_embs.dtype.itemsize)
    grid = (pl.cdiv(N, TN),)
    return pl.pallas_call(
        _score_kernel,
        out_shape=jax.ShapeDtypeStruct((N, 1), jnp.float32),
        grid=grid,
        in_specs=[
            pl.BlockSpec((TN, F), lambda i: (i, 0)),   # node_embs (native dtype)
            pl.BlockSpec((F, 1), lambda i: (0, 0)),    # normalized scorer
            pl.BlockSpec((TN, 1), lambda i: (i, 0)),   # mask (f32, has -inf)
        ],
        out_specs=pl.BlockSpec((TN, 1), lambda i: (i, 0)),
        compiler_params=pltpu.CompilerParams(
            dimension_semantics=("parallel",),
            vmem_limit_bytes=_SCORE_VMEM_LIMIT,
        ),
    )(node_embs, scorer_normalized, mask)


# ----------------------------------------------------------------------------
# Kernel 2: batched gather of the k selected rows + tanh(score) scaling.
#           G rows per grid step via G concurrent manual row-DMAs from HBM.
# ----------------------------------------------------------------------------
def _pick_gather_batch(k):
    if k < 8:
        return max(k, 1)
    for g in (32, 16, 8):
        if k % g == 0:
            return g
    return 8


def gather_and_scale(node_embs, topk_idx, scale):
    N, F = node_embs.shape
    k = topk_idx.shape[0]
    G = _pick_gather_batch(k)
    k_pad = ((k + G - 1) // G) * G
    if k_pad != k:
        pad = k_pad - k
        # Pad with the last (valid) index/score so padded DMAs stay in-bounds.
        topk_idx = jnp.concatenate(
            [topk_idx, jnp.broadcast_to(topk_idx[-1], (pad,))])
        scale = jnp.concatenate(
            [scale, jnp.broadcast_to(scale[-1], (pad,))])
    topk_idx = topk_idx.astype(jnp.int32)
    scale_col = scale.astype(jnp.float32).reshape(k_pad, 1)

    def _gather_scale_kernel(idx_ref, emb_hbm, scale_ref, out_ref, buf, sems):
        base = pl.program_id(0) * G
        copies = []
        # Issue all G row DMAs first so they are in flight concurrently.
        for j in range(G):
            cp = pltpu.make_async_copy(
                emb_hbm.at[pl.ds(idx_ref[base + j], 1), :],
                buf.at[pl.ds(j, 1), :],
                sems.at[j],
            )
            cp.start()
            copies.append(cp)
        for cp in copies:
            cp.wait()
        # Scale each gathered row by tanh(score); full (G, F) block store.
        out_ref[...] = buf[...].astype(jnp.float32) * scale_ref[...]

    grid_spec = pltpu.PrefetchScalarGridSpec(
        num_scalar_prefetch=1,            # topk_idx -> SMEM
        grid=(k_pad // G,),
        in_specs=[
            pl.BlockSpec(memory_space=pl.ANY),            # node_embs stays in HBM
            pl.BlockSpec((G, 1), lambda i, idx: (i, 0)),  # tanh(score) per row
        ],
        out_specs=pl.BlockSpec((G, F), lambda i, idx: (i, 0)),
        scratch_shapes=[
            pltpu.VMEM((G, F), node_embs.dtype),          # gathered rows
            pltpu.SemaphoreType.DMA((G,)),
        ],
    )
    out = pl.pallas_call(
        _gather_scale_kernel,
        grid_spec=grid_spec,
        out_shape=jax.ShapeDtypeStruct((k_pad, F), jnp.float32),
        compiler_params=pltpu.CompilerParams(
            dimension_semantics=("parallel",),            # distinct blocks, no carry
        ),
    )(topk_idx, node_embs, scale_col)
    return out[:k]


# ----------------------------------------------------------------------------
# Full forward (= TopK.forward)
# ----------------------------------------------------------------------------
def topk_forward(node_embs, mask, scorer, k):
    # Keep node_embs in its native dtype (bf16 stays bf16) — both kernels are
    # bound by reading node_embs from HBM.  Scores/accumulation stay f32.
    mask = mask.astype(jnp.float32)
    scorer_f32 = scorer.astype(jnp.float32)
    # Fold 1/||scorer|| into the weights once (tiny (F,1) op), cast to the
    # embedding dtype so the MXU runs a native (e.g. bf16 x bf16 -> f32) dot.
    scorer_n = (scorer_f32 / jnp.sqrt(jnp.sum(scorer_f32 * scorer_f32))
                ).astype(node_embs.dtype)

    # 1) scores (Pallas kernel, tiled over N)
    scores = compute_scores(node_embs, scorer_n, mask)       # (N, 1) f32

    # 2) top-k selection + -inf filtering + pad_with_last_val (JAX glue)
    # TODO(synk): data-dependent top-k left to lax.top_k (no clean static
    #             Pallas equivalent); hot matvec/gather paths are in-kernel.
    flat = scores.reshape(-1)
    vals, idxs = jax.lax.top_k(flat, k)                      # sorted descending
    valid = vals > -jnp.inf                                  # prefix of True's
    num_valid = jnp.sum(valid.astype(jnp.int32))
    last_slot = jnp.maximum(num_valid - 1, 0)
    topk_idx = jnp.where(valid, idxs, idxs[last_slot])       # pad with last val
    pad_vals = jnp.where(valid, vals, vals[last_slot])       # matching scores
    scale = jnp.tanh(pad_vals)                               # (k,)

    # 3) batched row gather + tanh scaling (Pallas kernel), transpose -> (F, k)
    out = gather_and_scale(node_embs, topk_idx, scale)       # (k, F) f32
    # Note: the transpose is kept to match the module's out.t(); drop it if a
    # downstream consumer can take (k, F) directly.
    return out.T                                             # (F, k)


# ----------------------------------------------------------------------------
# Pure-JAX reference (mirrors the wrapper's dtype handling)
# ----------------------------------------------------------------------------
def topk_reference(node_embs, mask, scorer, k):
    emb_f32 = node_embs.astype(jnp.float32)
    mask = mask.astype(jnp.float32)
    scorer_f32 = scorer.astype(jnp.float32)
    scorer_n = scorer_f32 / jnp.sqrt(jnp.sum(scorer_f32 * scorer_f32))
    scorer_n = scorer_n.astype(node_embs.dtype).astype(jnp.float32)
    scores = emb_f32 @ scorer_n + mask
    flat = scores.reshape(-1)
    vals, idxs = jax.lax.top_k(flat, k)
    valid = vals > -jnp.inf
    num_valid = jnp.sum(valid.astype(jnp.int32))
    last_slot = jnp.maximum(num_valid - 1, 0)
    topk_idx = jnp.where(valid, idxs, idxs[last_slot])
    pad_vals = jnp.where(valid, vals, vals[last_slot])
    out = emb_f32[topk_idx] * jnp.tanh(pad_vals)[:, None]
    return out.T


if __name__ == "__main__":
    N, F, K = 64, 128, 12                                    # nodes, feats, k

    key = jax.random.PRNGKey(0)
    k_emb, k_scorer = jax.random.split(key, 2)

    node_embs = jax.random.normal(k_emb, (N, F), dtype=jnp.float32)

    # deterministic init mirroring reset_param: uniform(-1/sqrt(F), 1/sqrt(F))
    stdv = 1.0 / math.sqrt(F)
    scorer = jax.random.uniform(k_scorer, (F, 1), dtype=jnp.float32,
                                minval=-stdv, maxval=stdv)

    # mask: mostly zeros, a few -inf entries (masked-out nodes)
    mask = jnp.zeros((N, 1), dtype=jnp.float32)
    mask = mask.at[5, 0].set(-jnp.inf)
    mask = mask.at[N - 1, 0].set(-jnp.inf)

    fwd = jax.jit(topk_forward, static_argnames=("k",))

    # 1) f32 path
    out = jax.block_until_ready(fwd(node_embs, mask, scorer, k=K))
    ref = topk_reference(node_embs, mask, scorer, K)
    assert out.shape == (F, K), out.shape
    assert jnp.allclose(out, ref, atol=1e-4, rtol=1e-4), "f32 mismatch"

    # 2) native-bf16 node_embs path (bf16 kept through both kernels)
    emb_bf16 = node_embs.astype(jnp.bfloat16)
    out_bf = jax.block_until_ready(fwd(emb_bf16, mask, scorer, k=K))
    ref_bf = topk_reference(emb_bf16, mask, scorer, K)
    assert out_bf.shape == (F, K), out_bf.shape
    assert jnp.allclose(out_bf, ref_bf, atol=2e-2, rtol=2e-2), "bf16 mismatch"

    # 3) fewer valid nodes than k -> exercises pad_with_last_val path
    mask_few = jnp.full((N, 1), -jnp.inf, dtype=jnp.float32)
    mask_few = mask_few.at[3, 0].set(0.0).at[17, 0].set(0.0).at[42, 0].set(0.0)
    out_few = jax.block_until_ready(fwd(node_embs, mask_few, scorer, k=K))
    ref_few = topk_reference(node_embs, mask_few, scorer, K)
    assert jnp.allclose(out_few, ref_few, atol=1e-4, rtol=1e-4), "pad mismatch"

    print("KERNEL_OK")
</pallas_src>

<mosaic_0001>
module attributes {stable_mosaic.version = 11 : i64} {
  func.func @_score_kernel(%arg0: i32, %arg1: memref<32x128xf32, #tpu.memory_space<vmem>>, %arg2: memref<128x1xf32, #tpu.memory_space<vmem>>, %arg3: memref<32x1xf32, #tpu.memory_space<vmem>>, %arg4: memref<32x1xf32, #tpu.memory_space<vmem>>) attributes {dimension_semantics = [#tpu.dimension_semantics<parallel>], iteration_bounds = array<i64: 2>, scalar_prefetch = 0 : i64, scratch_operands = 0 : i64, tpu.core_type = #tpu.core_type<tc>, window_params = [{transform_indices = @transform_0, window_bounds = array<i64: 32, 128>}, {pipeline_mode = #tpu.pipeline_mode<synchronous>, transform_indices = @transform_1, window_bounds = array<i64: 128, 1>}, {transform_indices = @transform_2, window_bounds = array<i64: 32, 1>}, {transform_indices = @transform_3, window_bounds = array<i64: 32, 1>}]} {
    %c0 = arith.constant 0 : index
    %c0_0 = arith.constant 0 : index
    %0 = vector.load %arg1[%c0, %c0_0] : memref<32x128xf32, #tpu.memory_space<vmem>>, vector<32x128xf32>
    %c0_1 = arith.constant 0 : index
    %c0_2 = arith.constant 0 : index
    %1 = vector.load %arg2[%c0_1, %c0_2] : memref<128x1xf32, #tpu.memory_space<vmem>>, vector<128x1xf32>
    %cst = arith.constant dense<0.000000e+00> : vector<32x1xf32>
    %2 = tpu.matmul %0, %1, %cst {dimension_numbers = #tpu.dot_dimension_numbers<[1], [0], [0], [1], [0, 0, 1, 1], [], []>} : vector<32x128xf32>, vector<128x1xf32>, vector<32x1xf32> -> vector<32x1xf32>
    %c0_3 = arith.constant 0 : index
    %c0_4 = arith.constant 0 : index
    %3 = vector.load %arg3[%c0_3, %c0_4] : memref<32x1xf32, #tpu.memory_space<vmem>>, vector<32x1xf32>
    %4 = arith.addf %2, %3 : vector<32x1xf32>
    %c0_5 = arith.constant 0 : index
    %c0_6 = arith.constant 0 : index
    %5 = vector.load %arg4[%c0_5, %c0_6] : memref<32x1xf32, #tpu.memory_space<vmem>>, vector<32x1xf32>
    tpu.vector_store %arg4[%c0_5, %c0_6], %4 {strides = array<i32>} : memref<32x1xf32, #tpu.memory_space<vmem>>, vector<32x1xf32>,
    return
  }
  func.func @transform_0(%arg0: i32) -> (i32, i32) {
    %c0_i32 = arith.constant 0 : i32
    %c0_i32_0 = arith.constant 0 : i32
    return %arg0, %c0_i32 : i32, i32
  }
  func.func @transform_1(%arg0: i32) -> (i32, i32) {
    %c0_i32 = arith.constant 0 : i32
    %c0_i32_0 = arith.constant 0 : i32
    %c0_i32_1 = arith.constant 0 : i32
    return %c0_i32, %c0_i32_0 : i32, i32
  }
  func.func @transform_2(%arg0: i32) -> (i32, i32) {
    %c0_i32 = arith.constant 0 : i32
    %c0_i32_0 = arith.constant 0 : i32
    return %arg0, %c0_i32 : i32, i32
  }
  func.func @transform_3(%arg0: i32) -> (i32, i32) {
    %c0_i32 = arith.constant 0 : i32
    %c0_i32_0 = arith.constant 0 : i32
    return %arg0, %c0_i32 : i32, i32
  }
}

module attributes {stable_mosaic.version = 11 : i64} {
  func.func @_gather_scale_kernel(%arg0: i32, %arg1: memref<16xi32, #tpu.memory_space<smem>>, %arg2: memref<64x128xf32, #tpu.memory_space<any>>, %arg3: memref<8x1xf32, #tpu.memory_space<vmem>>, %arg4: memref<8x128xf32, #tpu.memory_space<vmem>>, %arg5: memref<8x128xf32, #tpu.memory_space<vmem>>, %arg6: memref<8x!tpu.dma_semaphore, #tpu.memory_space<semaphore_mem>>) attributes {dimension_semantics = [#tpu.dimension_semantics<parallel>], iteration_bounds = array<i64: 2>, scalar_prefetch = 1 : i64, scratch_operands = 2 : i64, tpu.core_type = #tpu.core_type<tc>, window_params = [{}, {transform_indices = @transform_1, window_bounds = array<i64: 8, 1>}, {transform_indices = @transform_2, window_bounds = array<i64: 8, 128>}]} {
    %c8_i32 = arith.constant 8 : i32
    %0 = arith.muli %arg0, %c8_i32 : i32
    %c0_i32 = arith.constant 0 : i32
    %1 = arith.addi %0, %c0_i32 : i32
    %2 = arith.index_cast %1 : i32 to index
    %3 = memref.load %arg1[%2] : memref<16xi32, #tpu.memory_space<smem>>
    %c0_i32_0 = arith.constant 0 : i32
    %c0_i32_1 = arith.constant 0 : i32
    %4 = tpu.memref_slice %arg2[%3, %c0_i32_1] : memref<64x128xf32, #tpu.memory_space<any>> -> memref<1x128xf32, #tpu.memory_space<any>>
    %c0_i32_2 = arith.constant 0 : i32
    %c0_i32_3 = arith.constant 0 : i32
    %5 = tpu.memref_slice %arg5[%c0_i32_2, %c0_i32_3] : memref<8x128xf32, #tpu.memory_space<vmem>> -> memref<1x128xf32, #tpu.memory_space<vmem>>
    %6 = tpu.memref_slice %arg6[%c0_i32_0] : memref<8x!tpu.dma_semaphore, #tpu.memory_space<semaphore_mem>> -> memref<1x!tpu.dma_semaphore, #tpu.memory_space<semaphore_mem>>
    %7 = tpu.memref_squeeze %6 : memref<1x!tpu.dma_semaphore, #tpu.memory_space<semaphore_mem>> -> memref<!tpu.dma_semaphore, #tpu.memory_space<semaphore_mem>>
    tpu.enqueue_dma source(%4 : memref<1x128xf32, #tpu.memory_space<any>>) target(%5 : memref<1x128xf32, #tpu.memory_space<vmem>>) target_semaphore(%7 : memref<!tpu.dma_semaphore, #tpu.memory_space<semaphore_mem>>)
    %c1_i32 = arith.constant 1 : i32
    %8 = arith.addi %0, %c1_i32 : i32
    %9 = arith.index_cast %8 : i32 to index
    %10 = memref.load %arg1[%9] : memref<16xi32, #tpu.memory_space<smem>>
    %c1_i32_4 = arith.constant 1 : i32
    %c0_i32_5 = arith.constant 0 : i32
    %11 = tpu.memref_slice %arg2[%10, %c0_i32_5] : memref<64x128xf32, #tpu.memory_space<any>> -> memref<1x128xf32, #tpu.memory_space<any>>
    %c1_i32_6 = arith.constant 1 : i32
    %c0_i32_7 = arith.constant 0 : i32
    %12 = tpu.memref_slice %arg5[%c1_i32_6, %c0_i32_7] : memref<8x128xf32, #tpu.memory_space<vmem>> -> memref<1x128xf32, #tpu.memory_space<vmem>>
    %13 = tpu.memref_slice %arg6[%c1_i32_4] : memref<8x!tpu.dma_semaphore, #tpu.memory_space<semaphore_mem>> -> memref<1x!tpu.dma_semaphore, #tpu.memory_space<semaphore_mem>>
    %14 = tpu.memref_squeeze %13 : memref<1x!tpu.dma_semaphore, #tpu.memory_space<semaphore_mem>> -> memref<!tpu.dma_semaphore, #tpu.memory_space<semaphore_mem>>
    tpu.enqueue_dma source(%11 : memref<1x128xf32, #tpu.memory_space<any>>) target(%12 : memref<1x128xf32, #tpu.memory_space<vmem>>) target_semaphore(%14 : memref<!tpu.dma_semaphore, #tpu.memory_space<semaphore_mem>>)
    %c2_i32 = arith.constant 2 : i32
    %15 = arith.addi %0, %c2_i32 : i32
    %16 = arith.index_cast %15 : i32 to index
    %17 = memref.load %arg1[%16] : memref<16xi32, #tpu.memory_space<smem>>
    %c2_i32_8 = arith.constant 2 : i32
    %c0_i32_9 = arith.constant 0 : i32
    %18 = tpu.memref_slice %arg2[%17, %c0_i32_9] : memref<64x128xf32, #tpu.memory_space<any>> -> memref<1x128xf32, #tpu.memory_space<any>>
    %c2_i32_10 = arith.constant 2 : i32
    %c0_i32_11 = arith.constant 0 : i32
    %19 = tpu.memref_slice %arg5[%c2_i32_10, %c0_i32_11] : memref<8x128xf32, #tpu.memory_space<vmem>> -> memref<1x128xf32, #tpu.memory_space<vmem>>
    %20 = tpu.memref_slice %arg6[%c2_i32_8] : memref<8x!tpu.dma_semaphore, #tpu.memory_space<semaphore_mem>> -> memref<1x!tpu.dma_semaphore, #tpu.memory_space<semaphore_mem>>
    %21 = tpu.memref_squeeze %20 : memref<1x!tpu.dma_semaphore, #tpu.memory_space<semaphore_mem>> -> memref<!tpu.dma_semaphore, #tpu.memory_space<semaphore_mem>>
    tpu.enqueue_dma source(%18 : memref<1x128xf32, #tpu.memory_space<any>>) target(%19 : memref<1x128xf32, #tpu.memory_space<vmem>>) target_semaphore(%21 : memref<!tpu.dma_semaphore, #tpu.memory_space<semaphore_mem>>)
    %c3_i32 = arith.constant 3 : i32
    %22 = arith.addi %0, %c3_i32 : i32
    %23 = arith.index_cast %22 : i32 to index
    %24 = memref.load %arg1[%23] : memref<16xi32, #tpu.memory_space<smem>>
    %c3_i32_12 = arith.constant 3 : i32
    %c0_i32_13 = arith.constant 0 : i32
    %25 = tpu.memref_slice %arg2[%24, %c0_i32_13] : memref<64x128xf32, #tpu.memory_space<any>> -> memref<1x128xf32, #tpu.memory_space<any>>
    %c3_i32_14 = arith.constant 3 : i32
    %c0_i32_15 = arith.constant 0 : i32
    %26 = tpu.memref_slice %arg5[%c3_i32_14, %c0_i32_15] : memref<8x128xf32, #tpu.memory_space<vmem>> -> memref<1x128xf32, #tpu.memory_space<vmem>>
    %27 = tpu.memref_slice %arg6[%c3_i32_12] : memref<8x!tpu.dma_semaphore, #tpu.memory_space<semaphore_mem>> -> memref<1x!tpu.dma_semaphore, #tpu.memory_space<semaphore_mem>>
    %28 = tpu.memref_squeeze %27 : memref<1x!tpu.dma_semaphore, #tpu.memory_space<semaphore_mem>> -> memref<!tpu.dma_semaphore, #tpu.memory_space<semaphore_mem>>
    tpu.enqueue_dma source(%25 : memref<1x128xf32, #tpu.memory_space<any>>) target(%26 : memref<1x128xf32, #tpu.memory_space<vmem>>) target_semaphore(%28 : memref<!tpu.dma_semaphore, #tpu.memory_space<semaphore_mem>>)
    %c4_i32 = arith.constant 4 : i32
    %29 = arith.addi %0, %c4_i32 : i32
    %30 = arith.index_cast %29 : i32 to index
    %31 = memref.load %arg1[%30] : memref<16xi32, #tpu.memory_space<smem>>
    %c4_i32_16 = arith.constant 4 : i32
    %c0_i32_17 = arith.constant 0 : i32
    %32 = tpu.memref_slice %arg2[%31, %c0_i32_17] : memref<64x128xf32, #tpu.memory_space<any>> -> memref<1x128xf32, #tpu.memory_space<any>>
    %c4_i32_18 = arith.constant 4 : i32
    %c0_i32_19 = arith.constant 0 : i32
    %33 = tpu.memref_slice %arg5[%c4_i32_18, %c0_i32_19] : memref<8x128xf32, #tpu.memory_space<vmem>> -> memref<1x128xf32, #tpu.memory_space<vmem>>
    %34 = tpu.memref_slice %arg6[%c4_i32_16] : memref<8x!tpu.dma_semaphore, #tpu.memory_space<semaphore_mem>> -> memref<1x!tpu.dma_semaphore, #tpu.memory_space<semaphore_mem>>
    %35 = tpu.memref_squeeze %34 : memref<1x!tpu.dma_semaphore, #tpu.memory_space<semaphore_mem>> -> memref<!tpu.dma_semaphore, #tpu.memory_space<semaphore_mem>>
    tpu.enqueue_dma source(%32 : memref<1x128xf32, #tpu.memory_space<any>>) target(%33 : memref<1x128xf32, #tpu.memory_space<vmem>>) target_semaphore(%35 : memref<!tpu.dma_semaphore, #tpu.memory_space<semaphore_mem>>)
    %c5_i32 = arith.constant 5 : i32
    %36 = arith.addi %0, %c5_i32 : i32
    %37 = arith.index_cast %36 : i32 to index
    %38 = memref.load %arg1[%37] : memref<16xi32, #tpu.memory_space<smem>>
    %c5_i32_20 = arith.constant 5 : i32
    %c0_i32_21 = arith.constant 0 : i32
    %39 = tpu.memref_slice %arg2[%38, %c0_i32_21] : memref<64x128xf32, #tpu.memory_space<any>> -> memref<1x128xf32, #tpu.memory_space<any>>
    %c5_i32_22 = arith.constant 5 : i32
    %c0_i32_23 = arith.constant 0 : i32
    %40 = tpu.memref_slice %arg5[%c5_i32_22, %c0_i32_23] : memref<8x128xf32, #tpu.memory_space<vmem>> -> memref<1x128xf32, #tpu.memory_space<vmem>>
    %41 = tpu.memref_slice %arg6[%c5_i32_20] : memref<8x!tpu.dma_semaphore, #tpu.memory_space<semaphore_mem>> -> memref<1x!tpu.dma_semaphore, #tpu.memory_space<semaphore_mem>>
    %42 = tpu.memref_squeeze %41 : memref<1x!tpu.dma_semaphore, #tpu.memory_space<semaphore_mem>> -> memref<!tpu.dma_semaphore, #tpu.memory_space<semaphore_mem>>
    tpu.enqueue_dma source(%39 : memref<1x128xf32, #tpu.memory_space<any>>) target(%40 : memref<1x128xf32, #tpu.memory_space<vmem>>) target_semaphore(%42 : memref<!tpu.dma_semaphore, #tpu.memory_space<semaphore_mem>>)
    %c6_i32 = arith.constant 6 : i32
    %43 = arith.addi %0, %c6_i32 : i32
    %44 = arith.index_cast %43 : i32 to index
    %45 = memref.load %arg1[%44] : memref<16xi32, #tpu.memory_space<smem>>
    %c6_i32_24 = arith.constant 6 : i32
    %c0_i32_25 = arith.constant 0 : i32
    %46 = tpu.memref_slice %arg2[%45, %c0_i32_25] : memref<64x128xf32, #tpu.memory_space<any>> -> memref<1x128xf32, #tpu.memory_space<any>>
    %c6_i32_26 = arith.constant 6 : i32
    %c0_i32_27 = arith.constant 0 : i32
    %47 = tpu.memref_slice %arg5[%c6_i32_26, %c0_i32_27] : memref<8x128xf32, #tpu.memory_space<vmem>> -> memref<1x128xf32, #tpu.memory_space<vmem>>
    %48 = tpu.memref_slice %arg6[%c6_i32_24] : memref<8x!tpu.dma_semaphore, #tpu.memory_space<semaphore_mem>> -> memref<1x!tpu.dma_semaphore, #tpu.memory_space<semaphore_mem>>
    %49 = tpu.memref_squeeze %48 : memref<1x!tpu.dma_semaphore, #tpu.memory_space<semaphore_mem>> -> memref<!tpu.dma_semaphore, #tpu.memory_space<semaphore_mem>>
    tpu.enqueue_dma source(%46 : memref<1x128xf32, #tpu.memory_space<any>>) target(%47 : memref<1x128xf32, #tpu.memory_space<vmem>>) target_semaphore(%49 : memref<!tpu.dma_semaphore, #tpu.memory_space<semaphore_mem>>)
    %c7_i32 = arith.constant 7 : i32
    %50 = arith.addi %0, %c7_i32 : i32
    %51 = arith.index_cast %50 : i32 to index
    %52 = memref.load %arg1[%51] : memref<16xi32, #tpu.memory_space<smem>>
    %c7_i32_28 = arith.constant 7 : i32
    %c0_i32_29 = arith.constant 0 : i32
    %53 = tpu.memref_slice %arg2[%52, %c0_i32_29] : memref<64x128xf32, #tpu.memory_space<any>> -> memref<1x128xf32, #tpu.memory_space<any>>
    %c7_i32_30 = arith.constant 7 : i32
    %c0_i32_31 = arith.constant 0 : i32
    %54 = tpu.memref_slice %arg5[%c7_i32_30, %c0_i32_31] : memref<8x128xf32, #tpu.memory_space<vmem>> -> memref<1x128xf32, #tpu.memory_space<vmem>>
    %55 = tpu.memref_slice %arg6[%c7_i32_28] : memref<8x!tpu.dma_semaphore, #tpu.memory_space<semaphore_mem>> -> memref<1x!tpu.dma_semaphore, #tpu.memory_space<semaphore_mem>>
    %56 = tpu.memref_squeeze %55 : memref<1x!tpu.dma_semaphore, #tpu.memory_space<semaphore_mem>> -> memref<!tpu.dma_semaphore, #tpu.memory_space<semaphore_mem>>
    tpu.enqueue_dma source(%53 : memref<1x128xf32, #tpu.memory_space<any>>) target(%54 : memref<1x128xf32, #tpu.memory_space<vmem>>) target_semaphore(%56 : memref<!tpu.dma_semaphore, #tpu.memory_space<semaphore_mem>>)
    %c0_i32_32 = arith.constant 0 : i32
    %c0_i32_33 = arith.constant 0 : i32
    %57 = tpu.memref_slice %arg2[%3, %c0_i32_33] : memref<64x128xf32, #tpu.memory_space<any>> -> memref<1x128xf32, #tpu.memory_space<any>>
    %c0_i32_34 = arith.constant 0 : i32
    %c0_i32_35 = arith.constant 0 : i32
    %58 = tpu.memref_slice %arg5[%c0_i32_34, %c0_i32_35] : memref<8x128xf32, #tpu.memory_space<vmem>> -> memref<1x128xf32, #tpu.memory_space<vmem>>
    %59 = tpu.memref_slice %arg6[%c0_i32_32] : memref<8x!tpu.dma_semaphore, #tpu.memory_space<semaphore_mem>> -> memref<1x!tpu.dma_semaphore, #tpu.memory_space<semaphore_mem>>
    %60 = tpu.memref_squeeze %59 : memref<1x!tpu.dma_semaphore, #tpu.memory_space<semaphore_mem>> -> memref<!tpu.dma_semaphore, #tpu.memory_space<semaphore_mem>>
    tpu.wait_dma2 semaphore(%60 : memref<!tpu.dma_semaphore, #tpu.memory_space<semaphore_mem>>) src(%57 : memref<1x128xf32, #tpu.memory_space<any>>) dst(%58 : memref<1x128xf32, #tpu.memory_space<vmem>>)
    %c1_i32_36 = arith.constant 1 : i32
    %c0_i32_37 = arith.constant 0 : i32
    %61 = tpu.memref_slice %arg2[%10, %c0_i32_37] : memref<64x128xf32, #tpu.memory_space<any>> -> memref<1x128xf32, #tpu.memory_space<any>>
    %c1_i32_38 = arith.constant 1 : i32
    %c0_i32_39 = arith.constant 0 : i32
    %62 = tpu.memref_slice %arg5[%c1_i32_38, %c0_i32_39] : memref<8x128xf32, #tpu.memory_space<vmem>> -> memref<1x128xf32, #tpu.memory_space<vmem>>
    %63 = tpu.memref_slice %arg6[%c1_i32_36] : memref<8x!tpu.dma_semaphore, #tpu.memory_space<semaphore_mem>> -> memref<1x!tpu.dma_semaphore, #tpu.memory_space<semaphore_mem>>
    %64 = tpu.memref_squeeze %63 : memref<1x!tpu.dma_semaphore, #tpu.memory_space<semaphore_mem>> -> memref<!tpu.dma_semaphore, #tpu.memory_space<semaphore_mem>>
    tpu.wait_dma2 semaphore(%64 : memref<!tpu.dma_semaphore, #tpu.memory_space<semaphore_mem>>) src(%61 : memref<1x128xf32, #tpu.memory_space<any>>) dst(%62 : memref<1x128xf32, #tpu.memory_space<vmem>>)
    %c2_i32_40 = arith.constant 2 : i32
    %c0_i32_41 = arith.constant 0 : i32
    %65 = tpu.memref_slice %arg2[%17, %c0_i32_41] : memref<64x128xf32, #tpu.memory_space<any>> -> memref<1x128xf32, #tpu.memory_space<any>>
    %c2_i32_42 = arith.constant 2 : i32
    %c0_i32_43 = arith.constant 0 : i32
    %66 = tpu.memref_slice %arg5[%c2_i32_42, %c0_i32_43] : memref<8x128xf32, #tpu.memory_space<vmem>> -> memref<1x128xf32, #tpu.memory_space<vmem>>
    %67 = tpu.memref_slice %arg6[%c2_i32_40] : memref<8x!tpu.dma_semaphore, #tpu.memory_space<semaphore_mem>> -> memref<1x!tpu.dma_semaphore, #tpu.memory_space<semaphore_mem>>
    %68 = tpu.memref_squeeze %67 : memref<1x!tpu.dma_semaphore, #tpu.memory_space<semaphore_mem>> -> memref<!tpu.dma_semaphore, #tpu.memory_space<semaphore_mem>>
    tpu.wait_dma2 semaphore(%68 : memref<!tpu.dma_semaphore, #tpu.memory_space<semaphore_mem>>) src(%65 : memref<1x128xf32, #tpu.memory_space<any>>) dst(%66 : memref<1x128xf32, #tpu.memory_space<vmem>>)
    %c3_i32_44 = arith.constant 3 : i32
    %c0_i32_45 = arith.constant 0 : i32
    %69 = tpu.memref_slice %arg2[%24, %c0_i32_45] : memref<64x128xf32, #tpu.memory_space<any>> -> memref<1x128xf32, #tpu.memory_space<any>>
    %c3_i32_46 = arith.constant 3 : i32
    %c0_i32_47 = arith.constant 0 : i32
    %70 = tpu.memref_slice %arg5[%c3_i32_46, %c0_i32_47] : memref<8x128xf32, #tpu.memory_space<vmem>> -> memref<1x128xf32, #tpu.memory_space<vmem>>
    %71 = tpu.memref_slice %arg6[%c3_i32_44] : memref<8x!tpu.dma_semaphore, #tpu.memory_space<semaphore_mem>> -> memref<1x!tpu.dma_semaphore, #tpu.memory_space<semaphore_mem>>
    %72 = tpu.memref_squeeze %71 : memref<1x!tpu.dma_semaphore, #tpu.memory_space<semaphore_mem>> -> memref<!tpu.dma_semaphore, #tpu.memory_space<semaphore_mem>>
    tpu.wait_dma2 semaphore(%72 : memref<!tpu.dma_semaphore, #tpu.memory_space<semaphore_mem>>) src(%69 : memref<1x128xf32, #tpu.memory_space<any>>) dst(%70 : memref<1x128xf32, #tpu.memory_space<vmem>>)
    %c4_i32_48 = arith.constant 4 : i32
    %c0_i32_49 = arith.constant 0 : i32
    %73 = tpu.memref_slice %arg2[%31, %c0_i32_49] : memref<64x128xf32, #tpu.memory_space<any>> -> memref<1x128xf32, #tpu.memory_space<any>>
    %c4_i32_50 = arith.constant 4 : i32
    %c0_i32_51 = arith.constant 0 : i32
    %74 = tpu.memref_slice %arg5[%c4_i32_50, %c0_i32_51] : memref<8x128xf32, #tpu.memory_space<vmem>> -> memref<1x128xf32, #tpu.memory_space<vmem>>
    %75 = tpu.memref_slice %arg6[%c4_i32_48] : memref<8x!tpu.dma_semaphore, #tpu.memory_space<semaphore_mem>> -> memref<1x!tpu.dma_semaphore, #tpu.memory_space<semaphore_mem>>
    %76 = tpu.memref_squeeze %75 : memref<1x!tpu.dma_semaphore, #tpu.memory_space<semaphore_mem>> -> memref<!tpu.dma_semaphore, #tpu.memory_space<semaphore_mem>>
    tpu.wait_dma2 semaphore(%76 : memref<!tpu.dma_semaphore, #tpu.memory_space<semaphore_mem>>) src(%73 : memref<1x128xf32, #tpu.memory_space<any>>) dst(%74 : memref<1x128xf32, #tpu.memory_space<vmem>>)
    %c5_i32_52 = arith.constant 5 : i32
    %c0_i32_53 = arith.constant 0 : i32
    %77 = tpu.memref_slice %arg2[%38, %c0_i32_53] : memref<64x128xf32, #tpu.memory_space<any>> -> memref<1x128xf32, #tpu.memory_space<any>>
    %c5_i32_54 = arith.constant 5 : i32
    %c0_i32_55 = arith.constant 0 : i32
    %78 = tpu.memref_slice %arg5[%c5_i32_54, %c0_i32_55] : memref<8x128xf32, #tpu.memory_space<vmem>> -> memref<1x128xf32, #tpu.memory_space<vmem>>
    %79 = tpu.memref_slice %arg6[%c5_i32_52] : memref<8x!tpu.dma_semaphore, #tpu.memory_space<semaphore_mem>> -> memref<1x!tpu.dma_semaphore, #tpu.memory_space<semaphore_mem>>
    %80 = tpu.memref_squeeze %79 : memref<1x!tpu.dma_semaphore, #tpu.memory_space<semaphore_mem>> -> memref<!tpu.dma_semaphore, #tpu.memory_space<semaphore_mem>>
    tpu.wait_dma2 semaphore(%80 : memref<!tpu.dma_semaphore, #tpu.memory_space<semaphore_mem>>) src(%77 : memref<1x128xf32, #tpu.memory_space<any>>) dst(%78 : memref<1x128xf32, #tpu.memory_space<vmem>>)
    %c6_i32_56 = arith.constant 6 : i32
    %c0_i32_57 = arith.constant 0 : i32
    %81 = tpu.memref_slice %arg2[%45, %c0_i32_57] : memref<64x128xf32, #tpu.memory_space<any>> -> memref<1x128xf32, #tpu.memory_space<any>>
    %c6_i32_58 = arith.constant 6 : i32
    %c0_i32_59 = arith.constant 0 : i32
    %82 = tpu.memref_slice %arg5[%c6_i32_58, %c0_i32_59] : memref<8x128xf32, #tpu.memory_space<vmem>> -> memref<1x128xf32, #tpu.memory_space<vmem>>
    %83 = tpu.memref_slice %arg6[%c6_i32_56] : memref<8x!tpu.dma_semaphore, #tpu.memory_space<semaphore_mem>> -> memref<1x!tpu.dma_semaphore, #tpu.memory_space<semaphore_mem>>
    %84 = tpu.memref_squeeze %83 : memref<1x!tpu.dma_semaphore, #tpu.memory_space<semaphore_mem>> -> memref<!tpu.dma_semaphore, #tpu.memory_space<semaphore_mem>>
    tpu.wait_dma2 semaphore(%84 : memref<!tpu.dma_semaphore, #tpu.memory_space<semaphore_mem>>) src(%81 : memref<1x128xf32, #tpu.memory_space<any>>) dst(%82 : memref<1x128xf32, #tpu.memory_space<vmem>>)
    %c7_i32_60 = arith.constant 7 : i32
    %c0_i32_61 = arith.constant 0 : i32
    %85 = tpu.memref_slice %arg2[%52, %c0_i32_61] : memref<64x128xf32, #tpu.memory_space<any>> -> memref<1x128xf32, #tpu.memory_space<any>>
    %c7_i32_62 = arith.constant 7 : i32
    %c0_i32_63 = arith.constant 0 : i32
    %86 = tpu.memref_slice %arg5[%c7_i32_62, %c0_i32_63] : memref<8x128xf32, #tpu.memory_space<vmem>> -> memref<1x128xf32, #tpu.memory_space<vmem>>
    %87 = tpu.memref_slice %arg6[%c7_i32_60] : memref<8x!tpu.dma_semaphore, #tpu.memory_space<semaphore_mem>> -> memref<1x!tpu.dma_semaphore, #tpu.memory_space<semaphore_mem>>
    %88 = tpu.memref_squeeze %87 : memref<1x!tpu.dma_semaphore, #tpu.memory_space<semaphore_mem>> -> memref<!tpu.dma_semaphore, #tpu.memory_space<semaphore_mem>>
    tpu.wait_dma2 semaphore(%88 : memref<!tpu.dma_semaphore, #tpu.memory_space<semaphore_mem>>) src(%85 : memref<1x128xf32, #tpu.memory_space<any>>) dst(%86 : memref<1x128xf32, #tpu.memory_space<vmem>>)
    %c0 = arith.constant 0 : index
    %c0_64 = arith.constant 0 : index
    %89 = vector.load %arg5[%c0, %c0_64] : memref<8x128xf32, #tpu.memory_space<vmem>>, vector<8x128xf32>
    %c0_65 = arith.constant 0 : index
    %c0_66 = arith.constant 0 : index
    %90 = vector.load %arg3[%c0_65, %c0_66] : memref<8x1xf32, #tpu.memory_space<vmem>>, vector<8x1xf32>
    %91 = vector.broadcast %90 : vector<8x1xf32> to vector<8x128xf32>
    %92 = arith.mulf %89, %91 : vector<8x128xf32>
    %c0_67 = arith.constant 0 : index
    %c0_68 = arith.constant 0 : index
    %93 = vector.load %arg4[%c0_67, %c0_68] : memref<8x128xf32, #tpu.memory_space<vmem>>, vector<8x128xf32>
    tpu.vector_store %arg4[%c0_67, %c0_68], %92 {strides = array<i32>} : memref<8x128xf32, #tpu.memory_space<vmem>>, vector<8x128xf32>,
    return
  }
  func.func @transform_1(%arg0: i32, %arg1: memref<16xi32, #tpu.memory_space<smem>>) -> (i32, i32) {
    %c0_i32 = arith.constant 0 : i32
    %c0_i32_0 = arith.constant 0 : i32
    return %arg0, %c0_i32 : i32, i32
  }
  func.func @transform_2(%arg0: i32, %arg1: memref<16xi32, #tpu.memory_space<smem>>) -> (i32, i32) {
    %c0_i32 = arith.constant 0 : i32
    %c0_i32_0 = arith.constant 0 : i32
    return %arg0, %c0_i32 : i32, i32
  }
}

</mosaic_0001>

<llo_original>
// kernel: topk_forward.2
$region0: #{topk_forward.2}
  #allocation0 [shape = 'u32[]', space=smem, size = 0x4, offset = 0x4, fixed_abs, tag = 'smem constant byte address 0x4 - core index']
  #allocation1 [shape = 'u32[144,128]{1,0:T(1,128)}', space=vmem, size = 0x12000, scoped, tag = 'internal scratch']
  %s0 = inlined_call_operand.vmem [shape: f32[64,128], index: 0, kind: input, shape index: {}]
  %s1 = inlined_call_operand.vmem [shape: f32[128,1], index: 1, kind: input, shape index: {}]
  %s2 = inlined_call_operand.vmem [shape: f32[64,1], index: 2, kind: input, shape index: {}]
  %s3 = inlined_call_operand.vmem [shape: f32[64,1], index: 3, kind: output, shape index: {}]
  %s4 = sld [smem:[#allocation0]]
  $region45: #{topk_forward.2} parent=0
    _
  %s6 = ssub.s32 1, %s4
  %s7 = scalar_select 0, %s6, %s4
  loop: start=0, step=1, limit=4
  $region2: #{topk_forward.2} parent=0 // loop_pre_header
    _
  $region3: #{topk_forward.2} parent=0 // loop_header
    %s9 = sphi 0, %s13
    %p10 = scmp.ge.s32.totalorder %s9, 4
    %s19 = sphi 0, %s21
    %s22 = sphi 0, %s19
    %s23 = sphi 0, %s22
    %s39 = sphi 0, %s23
    %s43 = sphi 0, %s43
    %s45 = sphi 0, %s43
    %s46 = sphi 0, %s45
    %s60 = sphi 0, %s46
    %s66 = sphi 0, %s68
    %s69 = sphi 0, %s66
    %s70 = sphi 0, %s69
    %s86 = sphi 0, %s70
    %s92 = sphi 0, %s94
    %s95 = sphi 0, %s92
    %s96 = sphi 0, %s95
    %s112 = sphi 0, %s96
  $region4: #{topk_forward.2} parent=0 // loop_header_branch
    %12 = sbr.rel (%p10) target = $region8
  $region5: #{topk_forward.2} parent=0 // loop_body
    %s14 = ssub.s32 %s9, 1
    %s15 = ssub.s32 %s9, 2
    %s16 = sadd.s32 %s9, 1
    %s17 = ssub.s32 %s9, %s16
    %p18 = scmp.eq.s32.totalorder %s17, 0
    %s20 = sadd.s32 %s19, 1
    %s21 = scalar_select %p18, %s19, %s20
    %p24 = pneg %p18
    %p25 = scmp.eq.s32.totalorder %s9, 1
    %p26 = por %p24, %p25
    %p27 = scmp.ne.s32.totalorder %s19, %s22
    %p28 = scmp.eq.s32.totalorder %s9, 0
    %p29 = por %p27, %p28
    %p30 = scmp.ne.s32.totalorder %s19, %s22
    %p31 = scmp.eq.s32.totalorder %s14, 1
    %p32 = por %p30, %p31
    %p33 = scmp.ne.s32.totalorder %s22, %s23
    %p34 = scmp.eq.s32.totalorder %s14, 0
    %p35 = por %p33, %p34
    %p36 = scmp.ne.s32.totalorder %s22, %s23
    %p37 = scmp.eq.s32.totalorder %s15, 1
    %p38 = por %p36, %p37
    %p40 = scmp.ne.s32.totalorder %s23, %s39
    %p41 = scmp.eq.s32.totalorder %s15, 0
    %p42 = por %p40, %p41
    %s44 = sadd.s32 %s43, 1
    %p47 = scmp.eq.s32.totalorder %s9, 1
    %p48 = scmp.ne.s32.totalorder %s43, %s45
    %p49 = scmp.eq.s32.totalorder %s9, 0
    %p50 = por %p48, %p49
    %p51 = scmp.ne.s32.totalorder %s43, %s45
    %p52 = scmp.eq.s32.totalorder %s14, 1
    %p53 = por %p51, %p52
    %p54 = scmp.ne.s32.totalorder %s45, %s46
    %p55 = scmp.eq.s32.totalorder %s14, 0
    %p56 = por %p54, %p55
    %p57 = scmp.ne.s32.totalorder %s45, %s46
    %p58 = scmp.eq.s32.totalorder %s15, 1
    %p59 = por %p57, %p58
    %p61 = scmp.ne.s32.totalorder %s46, %s60
    %p62 = scmp.eq.s32.totalorder %s15, 0
    %p63 = por %p61, %p62
    %s64 = ssub.s32 %s9, %s16
    %p65 = scmp.eq.s32.totalorder %s64, 0
    %s67 = sadd.s32 %s66, 1
    %s68 = scalar_select %p65, %s66, %s67
    %p71 = pneg %p65
    %p72 = scmp.eq.s32.totalorder %s9, 1
    %p73 = por %p71, %p72
    %p74 = scmp.ne.s32.totalorder %s66, %s69
    %p75 = scmp.eq.s32.totalorder %s9, 0
    %p76 = por %p74, %p75
    %p77 = scmp.ne.s32.totalorder %s66, %s69
    %p78 = scmp.eq.s32.totalorder %s14, 1
    %p79 = por %p77, %p78
    %p80 = scmp.ne.s32.totalorder %s69, %s70
    %p81 = scmp.eq.s32.totalorder %s14, 0
    %p82 = por %p80, %p81
    %p83 = scmp.ne.s32.totalorder %s69, %s70
    %p84 = scmp.eq.s32.totalorder %s15, 1
    %p85 = por %p83, %p84
    %p87 = scmp.ne.s32.totalorder %s70, %s86
    %p88 = scmp.eq.s32.totalorder %s15, 0
    %p89 = por %p87, %p88
    %s90 = ssub.s32 %s9, %s16
    %p91 = scmp.eq.s32.totalorder %s90, 0
    %s93 = sadd.s32 %s92, 1
    %s94 = scalar_select %p91, %s92, %s93
    %p97 = pneg %p91
    %p98 = scmp.eq.s32.totalorder %s9, 1
    %p99 = por %p97, %p98
    %p100 = scmp.ne.s32.totalorder %s92, %s95
    %p101 = scmp.eq.s32.totalorder %s9, 0
    %p102 = por %p100, %p101
    %p103 = scmp.ne.s32.totalorder %s92, %s95
    %p104 = scmp.eq.s32.totalorder %s14, 1
    %p105 = por %p103, %p104
    %p106 = scmp.ne.s32.totalorder %s95, %s96
    %p107 = scmp.eq.s32.totalorder %s14, 0
    %p108 = por %p106, %p107
    %p109 = scmp.ne.s32.totalorder %s95, %s96
    %p110 = scmp.eq.s32.totalorder %s15, 1
    %p111 = por %p109, %p110
    %p113 = scmp.ne.s32.totalorder %s96, %s112
    %p114 = scmp.eq.s32.totalorder %s15, 0
    %p115 = por %p113, %p114
    %p116 = scmp.le.s32.totalorder 1, %s9
    %p117 = scmp.lt.s32.totalorder %s9, 3
    %p118 = pnand %p116, %p117
    %p119 = pneg %p118
    // Predicated region
    $region9: #{topk_forward.2} parent=5 // pred_check
      _
    $region10: #{topk_forward.2} parent=5 // pred_check_branch
      %121 = sbr.rel (%p118) target = $region12
    $region11: #{topk_forward.2} parent=5 // pred_region
      %s122 = ssub.s32 %s9, 1
      // Predicated region
      $region13: #{topk_forward.2} parent=11 // pred_check
        %p123 = pneg %p56
      $region14: #{topk_forward.2} parent=11 // pred_check_branch
        %125 = sbr.rel (%p123) target = $region16
      $region15: #{topk_forward.2} parent=11 // pred_region
        _
      $region16: #{topk_forward.2} parent=11 // pred_fallthru
        _
    $region12: #{topk_forward.2} parent=5 // pred_fallthru
      _
    %p126 = scmp.lt.s32.totalorder %s9, 2
    // Predicated region
    $region17: #{topk_forward.2} parent=5 // pred_check
      %p127 = pneg %p126
    $region18: #{topk_forward.2} parent=5 // pred_check_branch
      %129 = sbr.rel (%p127) target = $region20
    $region19: #{topk_forward.2} parent=5 // pred_region
      // Predicated region
      $region21: #{topk_forward.2} parent=19 // pred_check
        %p130 = pneg %p29
      $region22: #{topk_forward.2} parent=19 // pred_check_branch
        %132 = sbr.rel (%p130) target = $region24
      $region23: #{topk_forward.2} parent=19 // pred_region
        %s133 = smul.u32 4, %s9
        %p134 = scmp.lt.s32.totalorder %s133, 7
        %s135 = scalar_select %p134, %s133, 7
        %s136 = smul.addr %s135, 8
        %s137 = scalar_lea.vmem %s0, %s136
        %s138 = smul.u32 4, %s9
      $region24: #{topk_forward.2} parent=19 // pred_fallthru
        _
      // Predicated region
      $region25: #{topk_forward.2} parent=19 // pred_check
        %p139 = pneg %p76
      $region26: #{topk_forward.2} parent=19 // pred_check_branch
        %141 = sbr.rel (%p139) target = $region28
      $region27: #{topk_forward.2} parent=19 // pred_region
        %s142 = smul.u32 4, %s9
        %p143 = scmp.lt.s32.totalorder %s142, 7
        %s144 = scalar_select %p143, %s142, 7
        %s145 = smul.addr %s144, 8
        %s146 = scalar_lea.vmem %s2, %s145
        %s147 = smul.u32 4, %s9
      $region28: #{topk_forward.2} parent=19 // pred_fallthru
        _
    $region20: #{topk_forward.2} parent=5 // pred_fallthru
      _
    %p148 = scmp.le.s32.totalorder 1, %s9
    %p149 = scmp.lt.s32.totalorder %s9, 3
    %p150 = pnand %p148, %p149
    %p151 = pneg %p150
    // Predicated region
    $region29: #{topk_forward.2} parent=5 // pred_check
      _
    $region30: #{topk_forward.2} parent=5 // pred_check_branch
      %153 = sbr.rel (%p150) target = $region32
    $region31: #{topk_forward.2} parent=5 // pred_region
      %s154 = ssub.s32 %s9, 1
      %s155 = smul.u32 4, %s14
      %p156 = scmp.lt.s32.totalorder %s155, 7
      %s157 = scalar_select %p156, %s155, 7
      %s158 = smul.addr %s157, 8
      %s159 = scalar_lea.vmem %s0, %s158
      %p160 = pneg %p35
      %p161 = pneg %p32
      %p162 = pneg %p56
      %p163 = pneg %p53
      %s164 = smul.u32 4, %s14
      %p165 = scmp.lt.s32.totalorder %s164, 7
      %s166 = scalar_select %p165, %s164, 7
      %s167 = smul.addr %s166, 8
      %s168 = scalar_lea.vmem %s2, %s167
      %p169 = pneg %p82
      %p170 = pneg %p79
      %p171 = pneg %p108
      %p172 = pneg %p105
      %s173 = smul.u32 4, %s14
      %p174 = scmp.lt.s32.totalorder %s173, 7
      %s175 = scalar_select %p174, %s173, 7
      %s176 = smul.addr %s175, 8
      %s177 = scalar_lea.vmem %s3, %s176
      %s178 = smul.u32 4, %s14
      %p179 = scmp.lt.s32.totalorder %s178, 7
      %s180 = scalar_select %p179, %s178, 7
      %s181 = smul.addr %s180, 8
      %s182 = scalar_lea.vmem %s0, %s181
      %s183 = smul.u32 4, %s14
      %s184 = smul.u32 4, %s14
      %p185 = scmp.lt.s32.totalorder %s184, 7
      %s186 = scalar_select %p185, %s184, 7
      %s187 = smul.addr %s186, 8
      %s188 = scalar_lea.vmem %s2, %s187
      %s189 = smul.u32 4, %s14
      %s190 = smul.u32 4, %s14
      %p191 = scmp.lt.s32.totalorder %s190, 7
      %s192 = scalar_select %p191, %s190, 7
      %s193 = smul.addr %s192, 8
      %s194 = scalar_lea.vmem %s3, %s193
      %s195 = smul.u32 4, %s14
      %v196 = vld [vmem:[%s182] sm:$0xff]
      %v197 = vld [vmem:[%s182 + $0x8] sm:$0xff]
      %v198 = vld [vmem:[%s182 + $0x10] sm:$0xff]
      %v199 = vld [vmem:[%s182 + $0x18] sm:$0xff]
      %v200 = vld [vmem:[%s1] sm:$0xff]
      %v201 = vld [vmem:[%s1 + $0x8] sm:$0xff]
      %v202 = vld [vmem:[%s1 + $0x10] sm:$0xff]
      %v203 = vld [vmem:[%s1 + $0x18] sm:$0xff]
      %v204 = vld [vmem:[%s1 + $0x20] sm:$0xff]
      %v205 = vld [vmem:[%s1 + $0x28] sm:$0xff]
      %v206 = vld [vmem:[%s1 + $0x30] sm:$0xff]
      %v207 = vld [vmem:[%s1 + $0x38] sm:$0xff]
      %v208 = vld [vmem:[%s1 + $0x40] sm:$0xff]
      %v209 = vld [vmem:[%s1 + $0x48] sm:$0xff]
      %v210 = vld [vmem:[%s1 + $0x50] sm:$0xff]
      %v211 = vld [vmem:[%s1 + $0x58] sm:$0xff]
      %v212 = vld [vmem:[%s1 + $0x60] sm:$0xff]
      %v213 = vld [vmem:[%s1 + $0x68] sm:$0xff]
      %v214 = vld [vmem:[%s1 + $0x70] sm:$0xff]
      %v215 = vld [vmem:[%s1 + $0x78] sm:$0xff]
      %v216 = vld [vmem:[%s188] sm:$0xff]
      %v217 = vld [vmem:[%s188 + $0x8] sm:$0xff]
      %v218 = vld [vmem:[%s188 + $0x10] sm:$0xff]
      %v219 = vld [vmem:[%s188 + $0x18] sm:$0xff]
      %220 = vmatprep.subr.mxu0 0.0
      %221 = vmatpush1.msra.mxu0 %v200
      %222 = vmatprep.subr.mxu0 0.0
      %223 = vmatpush1.msra.mxu0 %v201
      %224 = vmatprep.subr.mxu0 0.0
      %225 = vmatpush1.msra.mxu0 %v202
      %226 = vmatprep.subr.mxu0 0.0
      %227 = vmatpush1.msra.mxu0 %v203
      %228 = vmatprep.subr.mxu0 0.0
      %229 = vmatpush1.msra.mxu0 %v204
      %230 = vmatprep.subr.mxu0 0.0
      %231 = vmatpush1.msra.mxu0 %v205
      %232 = vmatprep.subr.mxu0 0.0
      %233 = vmatpush1.msra.mxu0 %v206
      %234 = vmatprep.subr.mxu0 0.0
      %235 = vmatpush1.msra.mxu0 %v207
      %236 = vmatprep.subr.mxu0 0.0
      %237 = vmatpush1.msra.mxu0 %v208
      %238 = vmatprep.subr.mxu0 0.0
      %239 = vmatpush1.msra.mxu0 %v209
      %240 = vmatprep.subr.mxu0 0.0
      %241 = vmatpush1.msra.mxu0 %v210
      %242 = vmatprep.subr.mxu0 0.0
      %243 = vmatpush1.msra.mxu0 %v211
      %244 = vmatprep.subr.mxu0 0.0
      %245 = vmatpush1.msra.mxu0 %v212
      %246 = vmatprep.subr.mxu0 0.0
      %247 = vmatpush1.msra.mxu0 %v213
      %248 = vmatprep.subr.mxu0 0.0
      %249 = vmatpush1.msra.mxu0 %v214
      %250 = vmatprep.subr.mxu0 0.0
      %251 = vmatpush1.msra.mxu0 %v215
      %252 = vmatprep.subr.mxu0 0.0
      %253 = vmatpush1.msra.mxu0 0.0
      %254 = vmatprep.subr.mxu0 0.0
      %255 = vmatpush1.msra.mxu0 0.0
      %256 = vmatprep.subr.mxu0 0.0
      %257 = vmatpush1.msra.mxu0 0.0
      %258 = vmatprep.subr.mxu0 0.0
      %259 = vmatpush1.msra.mxu0 0.0
      %260 = vmatprep.subr.mxu0 0.0
      %261 = vmatpush1.msra.mxu0 0.0
      %262 = vmatprep.subr.mxu0 0.0
      %263 = vmatpush1.msra.mxu0 0.0
      %264 = vmatprep.subr.mxu0 0.0
      %265 = vmatpush1.msra.mxu0 0.0
      %266 = vmatprep.subr.mxu0 0.0
      %267 = vmatpush1.msra.mxu0 0.0
      %268 = vmatprep.subr.mxu0 0.0
      %269 = vmatpush1.msra.mxu0 0.0
      %270 = vmatprep.subr.mxu0 0.0
      %271 = vmatpush1.msra.mxu0 0.0
      %272 = vmatprep.subr.mxu0 0.0
      %273 = vmatpush1.msra.mxu0 0.0
      %274 = vmatprep.subr.mxu0 0.0
      %275 = vmatpush1.msra.mxu0 0.0
      %276 = vmatprep.subr.mxu0 0.0
      %277 = vmatpush1.msra.mxu0 0.0
      %278 = vmatprep.subr.mxu0 0.0
      %279 = vmatpush1.msra.mxu0 0.0
      %280 = vmatprep.subr.mxu0 0.0
      %281 = vmatpush1.msra.mxu0 0.0
      %282 = vmatprep.subr.mxu0 0.0
      %283 = vmatpush1.msra.mxu0 0.0
      %284 = vmatprep.mubr.f32.mxu0 0.0
      %285 = vmatmul.mubr.f32.gmra.mrb[0].mxu0 %v196
      %v286 = vpop.f32.mrb[0].mxu0
      %v287 = vadd.f32 %v216, %v286
      %v288 = vpop.f32.mrb[0].mxu0
      %289 = vmatprep.mubr.f32.mxu0 0.0
      %290 = vmatmul.mubr.f32.gmra.mrb[0].mxu0 %v197
      %v291 = vpop.f32.mrb[0].mxu0
      %v292 = vadd.f32 %v217, %v291
      %v293 = vpop.f32.mrb[0].mxu0
      %294 = vmatprep.mubr.f32.mxu0 0.0
      %295 = vmatmul.mubr.f32.gmra.mrb[0].mxu0 %v198
      %v296 = vpop.f32.mrb[0].mxu0
      %v297 = vadd.f32 %v218, %v296
      %v298 = vpop.f32.mrb[0].mxu0
      %299 = vmatprep.mubr.f32.mxu0 0.0
      %300 = vmatmul.mubr.f32.gmra.mrb[0].mxu0 %v199
      %v301 = vpop.f32.mrb[0].mxu0
      %v302 = vadd.f32 %v219, %v301
      %v303 = vpop.f32.mrb[0].mxu0
      %304 = vdwg.mxu0
      %vm305 = vcmask 7168
      %306 = vst.msk [vmem:[%s194] sm:$0xff] %vm305, %v287
      %307 = vst.msk [vmem:[%s194 + $0x8] sm:$0xff] %vm305, %v292
      %308 = vst.msk [vmem:[%s194 + $0x10] sm:$0xff] %vm305, %v297
      %309 = vst.msk [vmem:[%s194 + $0x18] sm:$0xff] %vm305, %v302
      %s310 = smul.u32 4, %s14
      %p311 = scmp.lt.s32.totalorder %s310, 7
      %s312 = scalar_select %p311, %s310, 7
      %s313 = smul.addr %s312, 8
      %s314 = scalar_lea.vmem %s3, %s313
      // Predicated region
      $region33: #{topk_forward.2} parent=31 // pred_check
        %p315 = pneg %p105
      $region34: #{topk_forward.2} parent=31 // pred_check_branch
        %317 = sbr.rel (%p315) target = $region36
      $region35: #{topk_forward.2} parent=31 // pred_region
        %s318 = smul.u32 4, %s14
      $region36: #{topk_forward.2} parent=31 // pred_fallthru
        _
    $region32: #{topk_forward.2} parent=5 // pred_fallthru
      _
    %p319 = scmp.le.s32.totalorder 2, %s9
    // Predicated region
    $region37: #{topk_forward.2} parent=5 // pred_check
      %p320 = pneg %p319
    $region38: #{topk_forward.2} parent=5 // pred_check_branch
      %322 = sbr.rel (%p320) target = $region40
    $region39: #{topk_forward.2} parent=5 // pred_region
      %s323 = ssub.s32 %s9, 2
      // Predicated region
      $region41: #{topk_forward.2} parent=39 // pred_check
        %p324 = pneg %p111
      $region42: #{topk_forward.2} parent=39 // pred_check_branch
        %326 = sbr.rel (%p324) target = $region44
      $region43: #{topk_forward.2} parent=39 // pred_region
        %s327 = smul.u32 4, %s15
        %p328 = scmp.lt.s32.totalorder %s327, 7
        %s329 = scalar_select %p328, %s327, 7
        %s330 = smul.addr %s329, 8
        %s331 = scalar_lea.vmem %s3, %s330
      $region44: #{topk_forward.2} parent=39 // pred_fallthru
        _
    $region40: #{topk_forward.2} parent=5 // pred_fallthru
      _
  $region6: #{topk_forward.2} parent=0 // loop_footer
    %s13 = sadd.s32 1, %s9
  $region7: #{topk_forward.2} parent=0 // loop_footer_branch
    %8 = sbr.rel target = $region3
  $region8: #{topk_forward.2} parent=0 // loop_exit
    _

// kernel: topk_forward.3
$region0: #{topk_forward.3}
  #allocation0 [shape = 'u32[]', space=smem, size = 0x4, offset = 0x4, fixed_abs, tag = 'smem constant byte address 0x4 - core index']
  #allocation1 [shape = 'u32[144,128]{1,0:T(1,128)}', space=vmem, size = 0x12000, scoped, tag = 'internal scratch']
  #allocation2 [shape = 'f32[8,128]{1,0:T(8,128)}', space=vmem, size = 0x1000, scoped, tag = 'scratch operand']
  #allocation3 [shape = 's32[8]{0}', space=sflag, size = 0x20, scoped, tag = 'scratch operand']
  #allocation4 [shape = 's32[1]{0}', space=sflag, size = 0x4, scoped, tag = 'scoped memory for topk_forward.3']
  #allocation5 [shape = 'u8[512]{0}', space=smem, size = 0x200, scoped, tag = 'prefetched SMEM operand 0']
  #allocation6 [shape = 's32[]', space=sflag, size = 0x4, offset = 0, fixed_abs, tag = 'sflag constant byte address 0x0 - dummy sync flag']
  #allocation7 [shape = 's32[]', space=sflag, size = 0x4, offset = 0, fixed_abs, tag = 'sflag constant byte address 0x0 - dummy sync flag']
  #allocation8 [shape = 's32[]', space=sflag, size = 0x4, offset = 0, fixed_abs, tag = 'sflag constant byte address 0x0 - dummy sync flag']
  #allocation9 [shape = 's32[]', space=sflag, size = 0x4, offset = 0, fixed_abs, tag = 'sflag constant byte address 0x0 - dummy sync flag']
  #allocation10 [shape = 's32[]', space=sflag, size = 0x4, offset = 0, fixed_abs, tag = 'sflag constant byte address 0x0 - dummy sync flag']
  #allocation11 [shape = 's32[]', space=sflag, size = 0x4, offset = 0, fixed_abs, tag = 'sflag constant byte address 0x0 - dummy sync flag']
  #allocation12 [shape = 's32[]', space=sflag, size = 0x4, offset = 0, fixed_abs, tag = 'sflag constant byte address 0x0 - dummy sync flag']
  #allocation13 [shape = 's32[]', space=sflag, size = 0x4, offset = 0, fixed_abs, tag = 'sflag constant byte address 0x0 - dummy sync flag']
  %s0 = inlined_call_operand.vmem [shape: s32[16], index: 0, kind: input, shape index: {}]
  %s1 = inlined_call_operand.vmem [shape: f32[64,128], index: 1, kind: input, shape index: {}]
  %s2 = inlined_call_operand.vmem [shape: f32[16,1], index: 2, kind: input, shape index: {}]
  %s3 = inlined_call_operand.vmem [shape: f32[16,128], index: 3, kind: output, shape index: {}]
  %s4 = sld [smem:[#allocation0]]
  $region277: #{topk_forward.3} parent=0
    _
  %s6 = ssub.s32 1, %s4
  %s7 = scalar_select 0, %s6, %s4
  %s8 = sshll.u32 %s0, 4
  %s9 = int_to_ptr.vmem [resolvable:$true] %s8
  %11 = dma.vmem_to_smem %s9, 16, [#allocation5], [#allocation4]
  %12 = dma.done [#allocation4], 16
  %13 = sfence
  loop: start=0, step=1, limit=4
  $region2: #{topk_forward.3} parent=0 // loop_pre_header
    _
  $region3: #{topk_forward.3} parent=0 // loop_header
    %s15 = sphi 0, %s19
    %p16 = scmp.ge.s32.totalorder %s15, 4
    %s25 = sphi 0, %s27
    %s28 = sphi 0, %s25
    %s29 = sphi 0, %s28
    %s45 = sphi 0, %s29
    %s51 = sphi 0, %s53
    %s54 = sphi 0, %s51
    %s55 = sphi 0, %s54
    %s71 = sphi 0, %s55
  $region4: #{topk_forward.3} parent=0 // loop_header_branch
    %18 = sbr.rel (%p16) target = $region8
  $region5: #{topk_forward.3} parent=0 // loop_body
    %s20 = ssub.s32 %s15, 1
    %s21 = ssub.s32 %s15, 2
    %s22 = sadd.s32 %s15, 1
    %s23 = ssub.s32 %s15, %s22
    %p24 = scmp.eq.s32.totalorder %s23, 0
    %s26 = sadd.s32 %s25, 1
    %s27 = scalar_select %p24, %s25, %s26
    %p30 = pneg %p24
    %p31 = scmp.eq.s32.totalorder %s15, 1
    %p32 = por %p30, %p31
    %p33 = scmp.ne.s32.totalorder %s25, %s28
    %p34 = scmp.eq.s32.totalorder %s15, 0
    %p35 = por %p33, %p34
    %p36 = scmp.ne.s32.totalorder %s25, %s28
    %p37 = scmp.eq.s32.totalorder %s20, 1
    %p38 = por %p36, %p37
    %p39 = scmp.ne.s32.totalorder %s28, %s29
    %p40 = scmp.eq.s32.totalorder %s20, 0
    %p41 = por %p39, %p40
    %p42 = scmp.ne.s32.totalorder %s28, %s29
    %p43 = scmp.eq.s32.totalorder %s21, 1
    %p44 = por %p42, %p43
    %p46 = scmp.ne.s32.totalorder %s29, %s45
    %p47 = scmp.eq.s32.totalorder %s21, 0
    %p48 = por %p46, %p47
    %s49 = ssub.s32 %s15, %s22
    %p50 = scmp.eq.s32.totalorder %s49, 0
    %s52 = sadd.s32 %s51, 1
    %s53 = scalar_select %p50, %s51, %s52
    %p56 = pneg %p50
    %p57 = scmp.eq.s32.totalorder %s15, 1
    %p58 = por %p56, %p57
    %p59 = scmp.ne.s32.totalorder %s51, %s54
    %p60 = scmp.eq.s32.totalorder %s15, 0
    %p61 = por %p59, %p60
    %p62 = scmp.ne.s32.totalorder %s51, %s54
    %p63 = scmp.eq.s32.totalorder %s20, 1
    %p64 = por %p62, %p63
    %p65 = scmp.ne.s32.totalorder %s54, %s55
    %p66 = scmp.eq.s32.totalorder %s20, 0
    %p67 = por %p65, %p66
    %p68 = scmp.ne.s32.totalorder %s54, %s55
    %p69 = scmp.eq.s32.totalorder %s21, 1
    %p70 = por %p68, %p69
    %p72 = scmp.ne.s32.totalorder %s55, %s71
    %p73 = scmp.eq.s32.totalorder %s21, 0
    %p74 = por %p72, %p73
    %p75 = scmp.le.s32.totalorder 1, %s15
    %p76 = scmp.lt.s32.totalorder %s15, 3
    %p77 = pnand %p75, %p76
    %p78 = pneg %p77
    // Predicated region
    $region9: #{topk_forward.3} parent=5 // pred_check
      _
    $region10: #{topk_forward.3} parent=5 // pred_check_branch
      %80 = sbr.rel (%p77) target = $region12
    $region11: #{topk_forward.3} parent=5 // pred_region
      %s81 = ssub.s32 %s15, 1
    $region12: #{topk_forward.3} parent=5 // pred_fallthru
      _
    %p82 = scmp.lt.s32.totalorder %s15, 2
    // Predicated region
    $region13: #{topk_forward.3} parent=5 // pred_check
      %p83 = pneg %p82
    $region14: #{topk_forward.3} parent=5 // pred_check_branch
      %85 = sbr.rel (%p83) target = $region16
    $region15: #{topk_forward.3} parent=5 // pred_region
      // Predicated region
      $region17: #{topk_forward.3} parent=15 // pred_check
        %p86 = pneg %p35
      $region18: #{topk_forward.3} parent=15 // pred_check_branch
        %88 = sbr.rel (%p86) target = $region20
      $region19: #{topk_forward.3} parent=15 // pred_region
        %p89 = scmp.lt.s32.totalorder %s15, 1
        %s90 = scalar_select %p89, %s15, 1
        %s91 = smul.addr %s90, 8
        %s92 = scalar_lea.vmem %s2, %s91
      $region20: #{topk_forward.3} parent=15 // pred_fallthru
        _
    $region16: #{topk_forward.3} parent=5 // pred_fallthru
      _
    %p93 = scmp.le.s32.totalorder 1, %s15
    %p94 = scmp.lt.s32.totalorder %s15, 3
    %p95 = pnand %p93, %p94
    %p96 = pneg %p95
    // Predicated region
    $region21: #{topk_forward.3} parent=5 // pred_check
      _
    $region22: #{topk_forward.3} parent=5 // pred_check_branch
      %98 = sbr.rel (%p95) target = $region24
    $region23: #{topk_forward.3} parent=5 // pred_region
      %s99 = ssub.s32 %s15, 1
      %p100 = scmp.lt.s32.totalorder %s20, 1
      %s101 = scalar_select %p100, %s20, 1
      %s102 = smul.addr %s101, 8
      %s103 = scalar_lea.vmem %s2, %s102
      %p104 = pneg %p41
      %p105 = pneg %p38
      %p106 = pneg %p67
      %p107 = pneg %p64
      %p108 = scmp.lt.s32.totalorder %s20, 1
      %s109 = scalar_select %p108, %s20, 1
      %s110 = smul.addr %s109, 8
      %s111 = scalar_lea.vmem %s3, %s110
      %p112 = scmp.lt.s32.totalorder %s20, 1
      %s113 = scalar_select %p112, %s20, 1
      %s114 = smul.addr %s113, 8
      %s115 = scalar_lea.vmem %s2, %s114
      %p116 = scmp.lt.s32.totalorder %s20, 1
      %s117 = scalar_select %p116, %s20, 1
      %s118 = smul.addr %s117, 8
      %s119 = scalar_lea.vmem %s3, %s118
      %s120 = smul.u32 %s20, 8
      %s121 = sld [smem:[#allocation5 + %s120]]
      %s122 = scalar_lea.vmem %s1, %s121
      %p124 = scmp.lt.u32.totalorder 1, 8
      %p125 = pneg %p124
      // Predicated region
      $region25: #{topk_forward.3} parent=23 // pred_check
        _
      $region26: #{topk_forward.3} parent=23 // pred_check_branch
        %127 = sbr.rel (%p124) target = $region28
      $region27: #{topk_forward.3} parent=23 // pred_region
        %s142 = sand.u32 1, 7
        %p143 = scmp.eq.s32.totalorder %s142, 0
        %p144 = pneg %p143
        // Predicated region
        $region40: #{topk_forward.3} parent=27 // pred_check
          _
        $region41: #{topk_forward.3} parent=27 // pred_check_branch
          %146 = sbr.rel (%p143) target = $region43
        $region42: #{topk_forward.3} parent=27 // pred_region
          %s147 = sand.u32 1, 7
          %s148 = ssub.s32 1, %s147
          %s149 = scalar_lea.vmem %s122, %s148
          %s150 = ssub.s32 1, %s147
          %s151 = scalar_lea.vmem [#allocation2], %s150
          %s152 = sshllo.u32 0, %s147
          loop: start=0, step=1, limit=1
          $region44: #{topk_forward.3} parent=42 // loop_pre_header
            _
          $region45: #{topk_forward.3} parent=42 // loop_header
            %s154 = sphi 0, %s158
            %p155 = scmp.ge.s32.totalorder %s154, 1
            %s159 = sphi %s149, %s149
            %s160 = sphi %s151, %s151
          $region46: #{topk_forward.3} parent=42 // loop_header_branch
            %157 = sbr.rel (%p155) target = $region50
          $region47: #{topk_forward.3} parent=42 // loop_body
            %v161 = vld [vmem:[%s159] sm:%s152]
            %162 = vst [vmem:[%s160] sm:%s152] %v161
          $region48: #{topk_forward.3} parent=42 // loop_footer
            %s158 = sadd.s32 1, %s154
          $region49: #{topk_forward.3} parent=42 // loop_footer_branch
            %153 = sbr.rel target = $region45
          $region50: #{topk_forward.3} parent=42 // loop_exit
            _
        $region43: #{topk_forward.3} parent=27 // pred_fallthru
          _
      $region28: #{topk_forward.3} parent=23 // pred_fallthru
        _
      // Predicated region
      $region29: #{topk_forward.3} parent=23 // pred_check
        %p128 = pneg %p124
      $region30: #{topk_forward.3} parent=23 // pred_check_branch
        %130 = sbr.rel (%p128) target = $region32
      $region31: #{topk_forward.3} parent=23 // pred_region
        %s131 = sshllo.u32 0, 1
        loop: start=0, step=1, limit=1
        $region33: #{topk_forward.3} parent=31 // loop_pre_header
          _
        $region34: #{topk_forward.3} parent=31 // loop_header
          %s133 = sphi 0, %s137
          %p134 = scmp.ge.s32.totalorder %s133, 1
          %s138 = sphi %s122, %s122
          %s139 = sphi [#allocation2], [#allocation2]
        $region35: #{topk_forward.3} parent=31 // loop_header_branch
          %136 = sbr.rel (%p134) target = $region39
        $region36: #{topk_forward.3} parent=31 // loop_body
          %v140 = vld [vmem:[%s138] sm:%s131]
          %141 = vst [vmem:[%s139] sm:%s131] %v140
        $region37: #{topk_forward.3} parent=31 // loop_footer
          %s137 = sadd.s32 1, %s133
        $region38: #{topk_forward.3} parent=31 // loop_footer_branch
          %132 = sbr.rel target = $region34
        $region39: #{topk_forward.3} parent=31 // loop_exit
          _
      $region32: #{topk_forward.3} parent=23 // pred_fallthru
        _
      // Predicated region
      $region51: #{topk_forward.3} parent=23 // pred_check
        _
      $region52: #{topk_forward.3} parent=23 // pred_check_branch
        %165 = sbr.rel (0) target = $region54
      $region53: #{topk_forward.3} parent=23 // pred_region
        %166 = vsyncadd [#allocation3], 16
      $region54: #{topk_forward.3} parent=23 // pred_fallthru
        _
      %s167 = sadd.s32 %s120, 1
      %s168 = sld [smem:[#allocation5 + %s167]]
      %s169 = scalar_lea.vmem %s1, %s168
      %s170 = scalar_lea.vmem [#allocation2], 1
      %s171 = scalar_lea.sflag [#allocation3], 1
      %p173 = scmp.lt.u32.totalorder 1, 8
      %p174 = pneg %p173
      // Predicated region
      $region55: #{topk_forward.3} parent=23 // pred_check
        _
      $region56: #{topk_forward.3} parent=23 // pred_check_branch
        %176 = sbr.rel (%p173) target = $region58
      $region57: #{topk_forward.3} parent=23 // pred_region
        %s191 = sand.u32 1, 7
        %p192 = scmp.eq.s32.totalorder %s191, 0
        %p193 = pneg %p192
        // Predicated region
        $region70: #{topk_forward.3} parent=57 // pred_check
          _
        $region71: #{topk_forward.3} parent=57 // pred_check_branch
          %195 = sbr.rel (%p192) target = $region73
        $region72: #{topk_forward.3} parent=57 // pred_region
          %s196 = sand.u32 1, 7
          %s197 = ssub.s32 1, %s196
          %s198 = scalar_lea.vmem %s169, %s197
          %s199 = ssub.s32 1, %s196
          %s200 = scalar_lea.vmem %s170, %s199 [#allocation2]
          %s201 = sshllo.u32 0, %s196
          loop: start=0, step=1, limit=1
          $region74: #{topk_forward.3} parent=72 // loop_pre_header
            _
          $region75: #{topk_forward.3} parent=72 // loop_header
            %s203 = sphi 0, %s207
            %p204 = scmp.ge.s32.totalorder %s203, 1
            %s208 = sphi %s198, %s198
            %s209 = sphi %s200, %s200
          $region76: #{topk_forward.3} parent=72 // loop_header_branch
            %206 = sbr.rel (%p204) target = $region80
          $region77: #{topk_forward.3} parent=72 // loop_body
            %v210 = vld [vmem:[%s208] sm:%s201]
            %211 = vst [vmem:[%s209] sm:%s201] %v210
          $region78: #{topk_forward.3} parent=72 // loop_footer
            %s207 = sadd.s32 1, %s203
          $region79: #{topk_forward.3} parent=72 // loop_footer_branch
            %202 = sbr.rel target = $region75
          $region80: #{topk_forward.3} parent=72 // loop_exit
            _
        $region73: #{topk_forward.3} parent=57 // pred_fallthru
          _
      $region58: #{topk_forward.3} parent=23 // pred_fallthru
        _
      // Predicated region
      $region59: #{topk_forward.3} parent=23 // pred_check
        %p177 = pneg %p173
      $region60: #{topk_forward.3} parent=23 // pred_check_branch
        %179 = sbr.rel (%p177) target = $region62
      $region61: #{topk_forward.3} parent=23 // pred_region
        %s180 = sshllo.u32 0, 1
        loop: start=0, step=1, limit=1
        $region63: #{topk_forward.3} parent=61 // loop_pre_header
          _
        $region64: #{topk_forward.3} parent=61 // loop_header
          %s182 = sphi 0, %s186
          %p183 = scmp.ge.s32.totalorder %s182, 1
          %s187 = sphi %s169, %s169
          %s188 = sphi %s170, %s170
        $region65: #{topk_forward.3} parent=61 // loop_header_branch
          %185 = sbr.rel (%p183) target = $region69
        $region66: #{topk_forward.3} parent=61 // loop_body
          %v189 = vld [vmem:[%s187] sm:%s180]
          %190 = vst [vmem:[%s188] sm:%s180] %v189
        $region67: #{topk_forward.3} parent=61 // loop_footer
          %s186 = sadd.s32 1, %s182
        $region68: #{topk_forward.3} parent=61 // loop_footer_branch
          %181 = sbr.rel target = $region64
        $region69: #{topk_forward.3} parent=61 // loop_exit
          _
      $region62: #{topk_forward.3} parent=23 // pred_fallthru
        _
      // Predicated region
      $region81: #{topk_forward.3} parent=23 // pred_check
        _
      $region82: #{topk_forward.3} parent=23 // pred_check_branch
        %214 = sbr.rel (0) target = $region84
      $region83: #{topk_forward.3} parent=23 // pred_region
        %215 = vsyncadd %s171, 16
      $region84: #{topk_forward.3} parent=23 // pred_fallthru
        _
      %s216 = sadd.s32 %s120, 2
      %s217 = sld [smem:[#allocation5 + %s216]]
      %s218 = scalar_lea.vmem %s1, %s217
      %s219 = scalar_lea.vmem [#allocation2], 2
      %s220 = scalar_lea.sflag [#allocation3], 2
      %p222 = scmp.lt.u32.totalorder 1, 8
      %p223 = pneg %p222
      // Predicated region
      $region85: #{topk_forward.3} parent=23 // pred_check
        _
      $region86: #{topk_forward.3} parent=23 // pred_check_branch
        %225 = sbr.rel (%p222) target = $region88
      $region87: #{topk_forward.3} parent=23 // pred_region
        %s240 = sand.u32 1, 7
        %p241 = scmp.eq.s32.totalorder %s240, 0
        %p242 = pneg %p241
        // Predicated region
        $region100: #{topk_forward.3} parent=87 // pred_check
          _
        $region101: #{topk_forward.3} parent=87 // pred_check_branch
          %244 = sbr.rel (%p241) target = $region103
        $region102: #{topk_forward.3} parent=87 // pred_region
          %s245 = sand.u32 1, 7
          %s246 = ssub.s32 1, %s245
          %s247 = scalar_lea.vmem %s218, %s246
          %s248 = ssub.s32 1, %s245
          %s249 = scalar_lea.vmem %s219, %s248 [#allocation2]
          %s250 = sshllo.u32 0, %s245
          loop: start=0, step=1, limit=1
          $region104: #{topk_forward.3} parent=102 // loop_pre_header
            _
          $region105: #{topk_forward.3} parent=102 // loop_header
            %s252 = sphi 0, %s256
            %p253 = scmp.ge.s32.totalorder %s252, 1
            %s257 = sphi %s247, %s247
            %s258 = sphi %s249, %s249
          $region106: #{topk_forward.3} parent=102 // loop_header_branch
            %255 = sbr.rel (%p253) target = $region110
          $region107: #{topk_forward.3} parent=102 // loop_body
            %v259 = vld [vmem:[%s257] sm:%s250]
            %260 = vst [vmem:[%s258] sm:%s250] %v259
          $region108: #{topk_forward.3} parent=102 // loop_footer
            %s256 = sadd.s32 1, %s252
          $region109: #{topk_forward.3} parent=102 // loop_footer_branch
            %251 = sbr.rel target = $region105
          $region110: #{topk_forward.3} parent=102 // loop_exit
            _
        $region103: #{topk_forward.3} parent=87 // pred_fallthru
          _
      $region88: #{topk_forward.3} parent=23 // pred_fallthru
        _
      // Predicated region
      $region89: #{topk_forward.3} parent=23 // pred_check
        %p226 = pneg %p222
      $region90: #{topk_forward.3} parent=23 // pred_check_branch
        %228 = sbr.rel (%p226) target = $region92
      $region91: #{topk_forward.3} parent=23 // pred_region
        %s229 = sshllo.u32 0, 1
        loop: start=0, step=1, limit=1
        $region93: #{topk_forward.3} parent=91 // loop_pre_header
          _
        $region94: #{topk_forward.3} parent=91 // loop_header
          %s231 = sphi 0, %s235
          %p232 = scmp.ge.s32.totalorder %s231, 1
          %s236 = sphi %s218, %s218
          %s237 = sphi %s219, %s219
        $region95: #{topk_forward.3} parent=91 // loop_header_branch
          %234 = sbr.rel (%p232) target = $region99
        $region96: #{topk_forward.3} parent=91 // loop_body
          %v238 = vld [vmem:[%s236] sm:%s229]
          %239 = vst [vmem:[%s237] sm:%s229] %v238
        $region97: #{topk_forward.3} parent=91 // loop_footer
          %s235 = sadd.s32 1, %s231
        $region98: #{topk_forward.3} parent=91 // loop_footer_branch
          %230 = sbr.rel target = $region94
        $region99: #{topk_forward.3} parent=91 // loop_exit
          _
      $region92: #{topk_forward.3} parent=23 // pred_fallthru
        _
      // Predicated region
      $region111: #{topk_forward.3} parent=23 // pred_check
        _
      $region112: #{topk_forward.3} parent=23 // pred_check_branch
        %263 = sbr.rel (0) target = $region114
      $region113: #{topk_forward.3} parent=23 // pred_region
        %264 = vsyncadd %s220, 16
      $region114: #{topk_forward.3} parent=23 // pred_fallthru
        _
      %s265 = sadd.s32 %s120, 3
      %s266 = sld [smem:[#allocation5 + %s265]]
      %s267 = scalar_lea.vmem %s1, %s266
      %s268 = scalar_lea.vmem [#allocation2], 3
      %s269 = scalar_lea.sflag [#allocation3], 3
      %p271 = scmp.lt.u32.totalorder 1, 8
      %p272 = pneg %p271
      // Predicated region
      $region115: #{topk_forward.3} parent=23 // pred_check
        _
      $region116: #{topk_forward.3} parent=23 // pred_check_branch
        %274 = sbr.rel (%p271) target = $region118
      $region117: #{topk_forward.3} parent=23 // pred_region
        %s289 = sand.u32 1, 7
        %p290 = scmp.eq.s32.totalorder %s289, 0
        %p291 = pneg %p290
        // Predicated region
        $region130: #{topk_forward.3} parent=117 // pred_check
          _
        $region131: #{topk_forward.3} parent=117 // pred_check_branch
          %293 = sbr.rel (%p290) target = $region133
        $region132: #{topk_forward.3} parent=117 // pred_region
          %s294 = sand.u32 1, 7
          %s295 = ssub.s32 1, %s294
          %s296 = scalar_lea.vmem %s267, %s295
          %s297 = ssub.s32 1, %s294
          %s298 = scalar_lea.vmem %s268, %s297 [#allocation2]
          %s299 = sshllo.u32 0, %s294
          loop: start=0, step=1, limit=1
          $region134: #{topk_forward.3} parent=132 // loop_pre_header
            _
          $region135: #{topk_forward.3} parent=132 // loop_header
            %s301 = sphi 0, %s305
            %p302 = scmp.ge.s32.totalorder %s301, 1
            %s306 = sphi %s296, %s296
            %s307 = sphi %s298, %s298
          $region136: #{topk_forward.3} parent=132 // loop_header_branch
            %304 = sbr.rel (%p302) target = $region140
          $region137: #{topk_forward.3} parent=132 // loop_body
            %v308 = vld [vmem:[%s306] sm:%s299]
            %309 = vst [vmem:[%s307] sm:%s299] %v308
          $region138: #{topk_forward.3} parent=132 // loop_footer
            %s305 = sadd.s32 1, %s301
          $region139: #{topk_forward.3} parent=132 // loop_footer_branch
            %300 = sbr.rel target = $region135
          $region140: #{topk_forward.3} parent=132 // loop_exit
            _
        $region133: #{topk_forward.3} parent=117 // pred_fallthru
          _
      $region118: #{topk_forward.3} parent=23 // pred_fallthru
        _
      // Predicated region
      $region119: #{topk_forward.3} parent=23 // pred_check
        %p275 = pneg %p271
      $region120: #{topk_forward.3} parent=23 // pred_check_branch
        %277 = sbr.rel (%p275) target = $region122
      $region121: #{topk_forward.3} parent=23 // pred_region
        %s278 = sshllo.u32 0, 1
        loop: start=0, step=1, limit=1
        $region123: #{topk_forward.3} parent=121 // loop_pre_header
          _
        $region124: #{topk_forward.3} parent=121 // loop_header
          %s280 = sphi 0, %s284
          %p281 = scmp.ge.s32.totalorder %s280, 1
          %s285 = sphi %s267, %s267
          %s286 = sphi %s268, %s268
        $region125: #{topk_forward.3} parent=121 // loop_header_branch
          %283 = sbr.rel (%p281) target = $region129
        $region126: #{topk_forward.3} parent=121 // loop_body
          %v287 = vld [vmem:[%s285] sm:%s278]
          %288 = vst [vmem:[%s286] sm:%s278] %v287
        $region127: #{topk_forward.3} parent=121 // loop_footer
          %s284 = sadd.s32 1, %s280
        $region128: #{topk_forward.3} parent=121 // loop_footer_branch
          %279 = sbr.rel target = $region124
        $region129: #{topk_forward.3} parent=121 // loop_exit
          _
      $region122: #{topk_forward.3} parent=23 // pred_fallthru
        _
      // Predicated region
      $region141: #{topk_forward.3} parent=23 // pred_check
        _
      $region142: #{topk_forward.3} parent=23 // pred_check_branch
        %312 = sbr.rel (0) target = $region144
      $region143: #{topk_forward.3} parent=23 // pred_region
        %313 = vsyncadd %s269, 16
      $region144: #{topk_forward.3} parent=23 // pred_fallthru
        _
      %s314 = sadd.s32 %s120, 4
      %s315 = sld [smem:[#allocation5 + %s314]]
      %s316 = scalar_lea.vmem %s1, %s315
      %s317 = scalar_lea.vmem [#allocation2], 4
      %s318 = scalar_lea.sflag [#allocation3], 4
      %p320 = scmp.lt.u32.totalorder 1, 8
      %p321 = pneg %p320
      // Predicated region
      $region145: #{topk_forward.3} parent=23 // pred_check
        _
      $region146: #{topk_forward.3} parent=23 // pred_check_branch
        %323 = sbr.rel (%p320) target = $region148
      $region147: #{topk_forward.3} parent=23 // pred_region
        %s338 = sand.u32 1, 7
        %p339 = scmp.eq.s32.totalorder %s338, 0
        %p340 = pneg %p339
        // Predicated region
        $region160: #{topk_forward.3} parent=147 // pred_check
          _
        $region161: #{topk_forward.3} parent=147 // pred_check_branch
          %342 = sbr.rel (%p339) target = $region163
        $region162: #{topk_forward.3} parent=147 // pred_region
          %s343 = sand.u32 1, 7
          %s344 = ssub.s32 1, %s343
          %s345 = scalar_lea.vmem %s316, %s344
          %s346 = ssub.s32 1, %s343
          %s347 = scalar_lea.vmem %s317, %s346 [#allocation2]
          %s348 = sshllo.u32 0, %s343
          loop: start=0, step=1, limit=1
          $region164: #{topk_forward.3} parent=162 // loop_pre_header
            _
          $region165: #{topk_forward.3} parent=162 // loop_header
            %s350 = sphi 0, %s354
            %p351 = scmp.ge.s32.totalorder %s350, 1
            %s355 = sphi %s345, %s345
            %s356 = sphi %s347, %s347
          $region166: #{topk_forward.3} parent=162 // loop_header_branch
            %353 = sbr.rel (%p351) target = $region170
          $region167: #{topk_forward.3} parent=162 // loop_body
            %v357 = vld [vmem:[%s355] sm:%s348]
            %358 = vst [vmem:[%s356] sm:%s348] %v357
          $region168: #{topk_forward.3} parent=162 // loop_footer
            %s354 = sadd.s32 1, %s350
          $region169: #{topk_forward.3} parent=162 // loop_footer_branch
            %349 = sbr.rel target = $region165
          $region170: #{topk_forward.3} parent=162 // loop_exit
            _
        $region163: #{topk_forward.3} parent=147 // pred_fallthru
          _
      $region148: #{topk_forward.3} parent=23 // pred_fallthru
        _
      // Predicated region
      $region149: #{topk_forward.3} parent=23 // pred_check
        %p324 = pneg %p320
      $region150: #{topk_forward.3} parent=23 // pred_check_branch
        %326 = sbr.rel (%p324) target = $region152
      $region151: #{topk_forward.3} parent=23 // pred_region
        %s327 = sshllo.u32 0, 1
        loop: start=0, step=1, limit=1
        $region153: #{topk_forward.3} parent=151 // loop_pre_header
          _
        $region154: #{topk_forward.3} parent=151 // loop_header
          %s329 = sphi 0, %s333
          %p330 = scmp.ge.s32.totalorder %s329, 1
          %s334 = sphi %s316, %s316
          %s335 = sphi %s317, %s317
        $region155: #{topk_forward.3} parent=151 // loop_header_branch
          %332 = sbr.rel (%p330) target = $region159
        $region156: #{topk_forward.3} parent=151 // loop_body
          %v336 = vld [vmem:[%s334] sm:%s327]
          %337 = vst [vmem:[%s335] sm:%s327] %v336
        $region157: #{topk_forward.3} parent=151 // loop_footer
          %s333 = sadd.s32 1, %s329
        $region158: #{topk_forward.3} parent=151 // loop_footer_branch
          %328 = sbr.rel target = $region154
        $region159: #{topk_forward.3} parent=151 // loop_exit
          _
      $region152: #{topk_forward.3} parent=23 // pred_fallthru
        _
      // Predicated region
      $region171: #{topk_forward.3} parent=23 // pred_check
        _
      $region172: #{topk_forward.3} parent=23 // pred_check_branch
        %361 = sbr.rel (0) target = $region174
      $region173: #{topk_forward.3} parent=23 // pred_region
        %362 = vsyncadd %s318, 16
      $region174: #{topk_forward.3} parent=23 // pred_fallthru
        _
      %s363 = sadd.s32 %s120, 5
      %s364 = sld [smem:[#allocation5 + %s363]]
      %s365 = scalar_lea.vmem %s1, %s364
      %s366 = scalar_lea.vmem [#allocation2], 5
      %s367 = scalar_lea.sflag [#allocation3], 5
      %p369 = scmp.lt.u32.totalorder 1, 8
      %p370 = pneg %p369
      // Predicated region
      $region175: #{topk_forward.3} parent=23 // pred_check
        _
      $region176: #{topk_forward.3} parent=23 // pred_check_branch
        %372 = sbr.rel (%p369) target = $region178
      $region177: #{topk_forward.3} parent=23 // pred_region
        %s387 = sand.u32 1, 7
        %p388 = scmp.eq.s32.totalorder %s387, 0
        %p389 = pneg %p388
        // Predicated region
        $region190: #{topk_forward.3} parent=177 // pred_check
          _
        $region191: #{topk_forward.3} parent=177 // pred_check_branch
          %391 = sbr.rel (%p388) target = $region193
        $region192: #{topk_forward.3} parent=177 // pred_region
          %s392 = sand.u32 1, 7
          %s393 = ssub.s32 1, %s392
          %s394 = scalar_lea.vmem %s365, %s393
          %s395 = ssub.s32 1, %s392
          %s396 = scalar_lea.vmem %s366, %s395 [#allocation2]
          %s397 = sshllo.u32 0, %s392
          loop: start=0, step=1, limit=1
          $region194: #{topk_forward.3} parent=192 // loop_pre_header
            _
          $region195: #{topk_forward.3} parent=192 // loop_header
            %s399 = sphi 0, %s403
            %p400 = scmp.ge.s32.totalorder %s399, 1
            %s404 = sphi %s394, %s394
            %s405 = sphi %s396, %s396
          $region196: #{topk_forward.3} parent=192 // loop_header_branch
            %402 = sbr.rel (%p400) target = $region200
          $region197: #{topk_forward.3} parent=192 // loop_body
            %v406 = vld [vmem:[%s404] sm:%s397]
            %407 = vst [vmem:[%s405] sm:%s397] %v406
          $region198: #{topk_forward.3} parent=192 // loop_footer
            %s403 = sadd.s32 1, %s399
          $region199: #{topk_forward.3} parent=192 // loop_footer_branch
            %398 = sbr.rel target = $region195
          $region200: #{topk_forward.3} parent=192 // loop_exit
            _
        $region193: #{topk_forward.3} parent=177 // pred_fallthru
          _
      $region178: #{topk_forward.3} parent=23 // pred_fallthru
        _
      // Predicated region
      $region179: #{topk_forward.3} parent=23 // pred_check
        %p373 = pneg %p369
      $region180: #{topk_forward.3} parent=23 // pred_check_branch
        %375 = sbr.rel (%p373) target = $region182
      $region181: #{topk_forward.3} parent=23 // pred_region
        %s376 = sshllo.u32 0, 1
        loop: start=0, step=1, limit=1
        $region183: #{topk_forward.3} parent=181 // loop_pre_header
          _
        $region184: #{topk_forward.3} parent=181 // loop_header
          %s378 = sphi 0, %s382
          %p379 = scmp.ge.s32.totalorder %s378, 1
          %s383 = sphi %s365, %s365
          %s384 = sphi %s366, %s366
        $region185: #{topk_forward.3} parent=181 // loop_header_branch
          %381 = sbr.rel (%p379) target = $region189
        $region186: #{topk_forward.3} parent=181 // loop_body
          %v385 = vld [vmem:[%s383] sm:%s376]
          %386 = vst [vmem:[%s384] sm:%s376] %v385
        $region187: #{topk_forward.3} parent=181 // loop_footer
          %s382 = sadd.s32 1, %s378
        $region188: #{topk_forward.3} parent=181 // loop_footer_branch
          %377 = sbr.rel target = $region184
        $region189: #{topk_forward.3} parent=181 // loop_exit
          _
      $region182: #{topk_forward.3} parent=23 // pred_fallthru
        _
      // Predicated region
      $region201: #{topk_forward.3} parent=23 // pred_check
        _
      $region202: #{topk_forward.3} parent=23 // pred_check_branch
        %410 = sbr.rel (0) target = $region204
      $region203: #{topk_forward.3} parent=23 // pred_region
        %411 = vsyncadd %s367, 16
      $region204: #{topk_forward.3} parent=23 // pred_fallthru
        _
      %s412 = sadd.s32 %s120, 6
      %s413 = sld [smem:[#allocation5 + %s412]]
      %s414 = scalar_lea.vmem %s1, %s413
      %s415 = scalar_lea.vmem [#allocation2], 6
      %s416 = scalar_lea.sflag [#allocation3], 6
      %p418 = scmp.lt.u32.totalorder 1, 8
      %p419 = pneg %p418
      // Predicated region
      $region205: #{topk_forward.3} parent=23 // pred_check
        _
      $region206: #{topk_forward.3} parent=23 // pred_check_branch
        %421 = sbr.rel (%p418) target = $region208
      $region207: #{topk_forward.3} parent=23 // pred_region
        %s436 = sand.u32 1, 7
        %p437 = scmp.eq.s32.totalorder %s436, 0
        %p438 = pneg %p437
        // Predicated region
        $region220: #{topk_forward.3} parent=207 // pred_check
          _
        $region221: #{topk_forward.3} parent=207 // pred_check_branch
          %440 = sbr.rel (%p437) target = $region223
        $region222: #{topk_forward.3} parent=207 // pred_region
          %s441 = sand.u32 1, 7
          %s442 = ssub.s32 1, %s441
          %s443 = scalar_lea.vmem %s414, %s442
          %s444 = ssub.s32 1, %s441
          %s445 = scalar_lea.vmem %s415, %s444 [#allocation2]
          %s446 = sshllo.u32 0, %s441
          loop: start=0, step=1, limit=1
          $region224: #{topk_forward.3} parent=222 // loop_pre_header
            _
          $region225: #{topk_forward.3} parent=222 // loop_header
            %s448 = sphi 0, %s452
            %p449 = scmp.ge.s32.totalorder %s448, 1
            %s453 = sphi %s443, %s443
            %s454 = sphi %s445, %s445
          $region226: #{topk_forward.3} parent=222 // loop_header_branch
            %451 = sbr.rel (%p449) target = $region230
          $region227: #{topk_forward.3} parent=222 // loop_body
            %v455 = vld [vmem:[%s453] sm:%s446]
            %456 = vst [vmem:[%s454] sm:%s446] %v455
          $region228: #{topk_forward.3} parent=222 // loop_footer
            %s452 = sadd.s32 1, %s448
          $region229: #{topk_forward.3} parent=222 // loop_footer_branch
            %447 = sbr.rel target = $region225
          $region230: #{topk_forward.3} parent=222 // loop_exit
            _
        $region223: #{topk_forward.3} parent=207 // pred_fallthru
          _
      $region208: #{topk_forward.3} parent=23 // pred_fallthru
        _
      // Predicated region
      $region209: #{topk_forward.3} parent=23 // pred_check
        %p422 = pneg %p418
      $region210: #{topk_forward.3} parent=23 // pred_check_branch
        %424 = sbr.rel (%p422) target = $region212
      $region211: #{topk_forward.3} parent=23 // pred_region
        %s425 = sshllo.u32 0, 1
        loop: start=0, step=1, limit=1
        $region213: #{topk_forward.3} parent=211 // loop_pre_header
          _
        $region214: #{topk_forward.3} parent=211 // loop_header
          %s427 = sphi 0, %s431
          %p428 = scmp.ge.s32.totalorder %s427, 1
          %s432 = sphi %s414, %s414
          %s433 = sphi %s415, %s415
        $region215: #{topk_forward.3} parent=211 // loop_header_branch
          %430 = sbr.rel (%p428) target = $region219
        $region216: #{topk_forward.3} parent=211 // loop_body
          %v434 = vld [vmem:[%s432] sm:%s425]
          %435 = vst [vmem:[%s433] sm:%s425] %v434
        $region217: #{topk_forward.3} parent=211 // loop_footer
          %s431 = sadd.s32 1, %s427
        $region218: #{topk_forward.3} parent=211 // loop_footer_branch
          %426 = sbr.rel target = $region214
        $region219: #{topk_forward.3} parent=211 // loop_exit
          _
      $region212: #{topk_forward.3} parent=23 // pred_fallthru
        _
      // Predicated region
      $region231: #{topk_forward.3} parent=23 // pred_check
        _
      $region232: #{topk_forward.3} parent=23 // pred_check_branch
        %459 = sbr.rel (0) target = $region234
      $region233: #{topk_forward.3} parent=23 // pred_region
        %460 = vsyncadd %s416, 16
      $region234: #{topk_forward.3} parent=23 // pred_fallthru
        _
      %s461 = sadd.s32 %s120, 7
      %s462 = sld [smem:[#allocation5 + %s461]]
      %s463 = scalar_lea.vmem %s1, %s462
      %s464 = scalar_lea.vmem [#allocation2], 7
      %s465 = scalar_lea.sflag [#allocation3], 7
      %p467 = scmp.lt.u32.totalorder 1, 8
      %p468 = pneg %p467
      // Predicated region
      $region235: #{topk_forward.3} parent=23 // pred_check
        _
      $region236: #{topk_forward.3} parent=23 // pred_check_branch
        %470 = sbr.rel (%p467) target = $region238
      $region237: #{topk_forward.3} parent=23 // pred_region
        %s485 = sand.u32 1, 7
        %p486 = scmp.eq.s32.totalorder %s485, 0
        %p487 = pneg %p486
        // Predicated region
        $region250: #{topk_forward.3} parent=237 // pred_check
          _
        $region251: #{topk_forward.3} parent=237 // pred_check_branch
          %489 = sbr.rel (%p486) target = $region253
        $region252: #{topk_forward.3} parent=237 // pred_region
          %s490 = sand.u32 1, 7
          %s491 = ssub.s32 1, %s490
          %s492 = scalar_lea.vmem %s463, %s491
          %s493 = ssub.s32 1, %s490
          %s494 = scalar_lea.vmem %s464, %s493 [#allocation2]
          %s495 = sshllo.u32 0, %s490
          loop: start=0, step=1, limit=1
          $region254: #{topk_forward.3} parent=252 // loop_pre_header
            _
          $region255: #{topk_forward.3} parent=252 // loop_header
            %s497 = sphi 0, %s501
            %p498 = scmp.ge.s32.totalorder %s497, 1
            %s502 = sphi %s492, %s492
            %s503 = sphi %s494, %s494
          $region256: #{topk_forward.3} parent=252 // loop_header_branch
            %500 = sbr.rel (%p498) target = $region260
          $region257: #{topk_forward.3} parent=252 // loop_body
            %v504 = vld [vmem:[%s502] sm:%s495]
            %505 = vst [vmem:[%s503] sm:%s495] %v504
          $region258: #{topk_forward.3} parent=252 // loop_footer
            %s501 = sadd.s32 1, %s497
          $region259: #{topk_forward.3} parent=252 // loop_footer_branch
            %496 = sbr.rel target = $region255
          $region260: #{topk_forward.3} parent=252 // loop_exit
            _
        $region253: #{topk_forward.3} parent=237 // pred_fallthru
          _
      $region238: #{topk_forward.3} parent=23 // pred_fallthru
        _
      // Predicated region
      $region239: #{topk_forward.3} parent=23 // pred_check
        %p471 = pneg %p467
      $region240: #{topk_forward.3} parent=23 // pred_check_branch
        %473 = sbr.rel (%p471) target = $region242
      $region241: #{topk_forward.3} parent=23 // pred_region
        %s474 = sshllo.u32 0, 1
        loop: start=0, step=1, limit=1
        $region243: #{topk_forward.3} parent=241 // loop_pre_header
          _
        $region244: #{topk_forward.3} parent=241 // loop_header
          %s476 = sphi 0, %s480
          %p477 = scmp.ge.s32.totalorder %s476, 1
          %s481 = sphi %s463, %s463
          %s482 = sphi %s464, %s464
        $region245: #{topk_forward.3} parent=241 // loop_header_branch
          %479 = sbr.rel (%p477) target = $region249
        $region246: #{topk_forward.3} parent=241 // loop_body
          %v483 = vld [vmem:[%s481] sm:%s474]
          %484 = vst [vmem:[%s482] sm:%s474] %v483
        $region247: #{topk_forward.3} parent=241 // loop_footer
          %s480 = sadd.s32 1, %s476
        $region248: #{topk_forward.3} parent=241 // loop_footer_branch
          %475 = sbr.rel target = $region244
        $region249: #{topk_forward.3} parent=241 // loop_exit
          _
      $region242: #{topk_forward.3} parent=23 // pred_fallthru
        _
      // Predicated region
      $region261: #{topk_forward.3} parent=23 // pred_check
        _
      $region262: #{topk_forward.3} parent=23 // pred_check_branch
        %508 = sbr.rel (0) target = $region264
      $region263: #{topk_forward.3} parent=23 // pred_region
        %509 = vsyncadd %s465, 16
      $region264: #{topk_forward.3} parent=23 // pred_fallthru
        _
      %s510 = smul.u32 1, 1
      %s511 = sshll.u32 %s510, 4
      %512 = dma.done [#allocation3], %s511
      %s513 = sshll.u32 %s510, 4
      %514 = dma.done %s171, %s513
      %s515 = sshll.u32 %s510, 4
      %516 = dma.done %s220, %s515
      %s517 = sshll.u32 %s510, 4
      %518 = dma.done %s269, %s517
      %s519 = sshll.u32 %s510, 4
      %520 = dma.done %s318, %s519
      %s521 = sshll.u32 %s510, 4
      %522 = dma.done %s367, %s521
      %s523 = sshll.u32 %s510, 4
      %524 = dma.done %s416, %s523
      %s525 = sshll.u32 %s510, 4
      %526 = dma.done %s465, %s525
      %v527 = vld [vmem:[#allocation2] sm:$0xff]
      %v528 = vld [vmem:[%s115] sm:$0xff]
      %530 = vset.pattern.permute.xlu0 0
      %531 = vperm.xlu0 %530, %v528
      %v532 = vpop.permute.xlu0 %531
      %v534 = vmul.f32 %v527, %v532
      %535 = vst [vmem:[%s119] sm:$0xff] %v534
      %p536 = scmp.lt.s32.totalorder %s20, 1
      %s537 = scalar_select %p536, %s20, 1
      %s538 = smul.addr %s537, 8
      %s539 = scalar_lea.vmem %s3, %s538
      // Predicated region
      $region265: #{topk_forward.3} parent=23 // pred_check
        %p540 = pneg %p64
      $region266: #{topk_forward.3} parent=23 // pred_check_branch
        %542 = sbr.rel (%p540) target = $region268
      $region267: #{topk_forward.3} parent=23 // pred_region
        _
      $region268: #{topk_forward.3} parent=23 // pred_fallthru
        _
    $region24: #{topk_forward.3} parent=5 // pred_fallthru
      _
    %p543 = scmp.le.s32.totalorder 2, %s15
    // Predicated region
    $region269: #{topk_forward.3} parent=5 // pred_check
      %p544 = pneg %p543
    $region270: #{topk_forward.3} parent=5 // pred_check_branch
      %546 = sbr.rel (%p544) target = $region272
    $region271: #{topk_forward.3} parent=5 // pred_region
      %s547 = ssub.s32 %s15, 2
      // Predicated region
      $region273: #{topk_forward.3} parent=271 // pred_check
        %p548 = pneg %p70
      $region274: #{topk_forward.3} parent=271 // pred_check_branch
        %550 = sbr.rel (%p548) target = $region276
      $region275: #{topk_forward.3} parent=271 // pred_region
        %p551 = scmp.lt.s32.totalorder %s21, 1
        %s552 = scalar_select %p551, %s21, 1
        %s553 = smul.addr %s552, 8
        %s554 = scalar_lea.vmem %s3, %s553
      $region276: #{topk_forward.3} parent=271 // pred_fallthru
        _
    $region272: #{topk_forward.3} parent=5 // pred_fallthru
      _
  $region6: #{topk_forward.3} parent=0 // loop_footer
    %s19 = sadd.s32 1, %s15
  $region7: #{topk_forward.3} parent=0 // loop_footer_branch
    %14 = sbr.rel target = $region3
  $region8: #{topk_forward.3} parent=0 // loop_exit
    _
  %555 = vsyncmov [#allocation3]
  %s556 = vpop.sfrf %555
  %p557 = scmp.eq.s32.totalorder %s556, 0
  %p558 = pneg %p557
  %560 = shalt.err (%p558)
  %s561 = scalar_lea.sflag [#allocation3], 1
  %562 = vsyncmov %s561
  %s563 = vpop.sfrf %562
  %p564 = scmp.eq.s32.totalorder %s563, 0
  %p565 = pneg %p564
  %567 = shalt.err (%p565)
  %s568 = scalar_lea.sflag [#allocation3], 2
  %569 = vsyncmov %s568
  %s570 = vpop.sfrf %569
  %p571 = scmp.eq.s32.totalorder %s570, 0
  %p572 = pneg %p571
  %574 = shalt.err (%p572)
  %s575 = scalar_lea.sflag [#allocation3], 3
  %576 = vsyncmov %s575
  %s577 = vpop.sfrf %576
  %p578 = scmp.eq.s32.totalorder %s577, 0
  %p579 = pneg %p578
  %581 = shalt.err (%p579)
  %s582 = scalar_lea.sflag [#allocation3], 4
  %583 = vsyncmov %s582
  %s584 = vpop.sfrf %583
  %p585 = scmp.eq.s32.totalorder %s584, 0
  %p586 = pneg %p585
  %588 = shalt.err (%p586)
  %s589 = scalar_lea.sflag [#allocation3], 5
  %590 = vsyncmov %s589
  %s591 = vpop.sfrf %590
  %p592 = scmp.eq.s32.totalorder %s591, 0
  %p593 = pneg %p592
  %595 = shalt.err (%p593)
  %s596 = scalar_lea.sflag [#allocation3], 6
  %597 = vsyncmov %s596
  %s598 = vpop.sfrf %597
  %p599 = scmp.eq.s32.totalorder %s598, 0
  %p600 = pneg %p599
  %602 = shalt.err (%p600)
  %s603 = scalar_lea.sflag [#allocation3], 7
  %604 = vsyncmov %s603
  %s605 = vpop.sfrf %604
  %p606 = scmp.eq.s32.totalorder %s605, 0
  %p607 = pneg %p606
  %609 = shalt.err (%p607)

</llo_original>
